<compile_context>
chip_gen: v5e
topology: v5e:2x2
jax: 0.10.0
libtpu: 0.0.40
codegen_flags: <defaults>
</compile_context>

<pallas_src>
import functools

import jax
import jax.numpy as jnp
from jax.experimental import pallas as pl
from jax.experimental.pallas import tpu as pltpu

# ----------------------- small synthetic config -----------------------------
VOCAB = 256        # vocab_size
HIDDEN = 128       # hidden_size
INTER = 256        # intermediate_size
N_LAYERS = 2       # num_hidden_layers
MAX_POS = 32       # max_position_embeddings
EPS = 1e-5         # layer_norm_eps
BATCH = 2
SEQ = 8


# ----------------------------- Pallas kernel ---------------------------------
def _fused_model_kernel(ids_ref, pid_ref, emb_ref, pos_ref, nw_ref, wgu_ref,
                        wd_ref, wh_ref, bh_ref, o_ref, *, n_layers, inter, eps):
    """Embeddings + all transformer blocks + final RMSNorm + LM head.

    One grid step processes one token tile end-to-end; the residual stream
    lives in registers/VMEM for the whole kernel body (no layer grid axis).
    """
    tm = o_ref.shape[0]

    # ---- fused embedding lookup: one-hot matmuls on VMEM-resident tables ----
    ids = ids_ref[...]                                           # (tm, 1) int32
    pids = pid_ref[...]                                          # (tm, 1) int32
    vocab = emb_ref.shape[0]
    max_pos = pos_ref.shape[0]
    tok_oh = (ids == jax.lax.broadcasted_iota(jnp.int32, (tm, vocab), 1)
              ).astype(jnp.float32)                              # (tm, V)
    pos_oh = (pids == jax.lax.broadcasted_iota(jnp.int32, (tm, max_pos), 1)
              ).astype(jnp.float32)                              # (tm, P)
    x = (jnp.dot(tok_oh, emb_ref[...], preferred_element_type=jnp.float32)
         + jnp.dot(pos_oh, pos_ref[...], preferred_element_type=jnp.float32))

    # ---- transformer blocks, statically unrolled (attention is a no-op in
    #      the reference: its forward returns None, so that branch is skipped) ----
    for l in range(n_layers):
        ms = jnp.mean(x * x, axis=-1, keepdims=True)             # (tm, 1)
        h = x * jax.lax.rsqrt(ms + eps) * nw_ref[l]              # post_attention_norm
        gu = jnp.dot(h.astype(jnp.bfloat16), wgu_ref[l],
                     preferred_element_type=jnp.float32)         # (tm, 2I) f32
        g = gu[:, :inter]
        u = gu[:, inter:]
        a = (g * jax.nn.sigmoid(g)) * u                          # SiLU(gate) * up
        x = x + jnp.dot(a.astype(jnp.bfloat16), wd_ref[l],
                        preferred_element_type=jnp.float32)      # residual

    # ---- final RMSNorm (gamma pre-folded into head weights) + LM head ----
    msy = jnp.mean(x * x, axis=-1, keepdims=True)
    hy = x * jax.lax.rsqrt(msy + eps)                            # (tm, H) f32
    logits = jnp.dot(hy.astype(jnp.bfloat16), wh_ref[...],
                     preferred_element_type=jnp.float32)         # (tm, V) f32
    o_ref[...] = logits + bh_ref[...]


def _pick_tm(m):
    # v7x has 2 TensorCores sharded over the "parallel" grid axis; give each
    # core its own tile once there are >= 32 rows.  Keep tm a multiple of 16
    # so the in-kernel f32->bf16 cast stays sublane-pack aligned.
    if m >= 32 and m % 32 == 0:
        return min(m // 2, 128)
    return min(m, 128)


def pallas_model(ids2d, pid2d, emb, pos, norm_w, wgu, wd, wh, bh):
    """ids2d/pid2d: (M, 1) int32 -> (M, V) f32 logits (fully fused model)."""
    M = ids2d.shape[0]
    VOC, H = emb.shape
    P = pos.shape[0]
    L, _, I2 = wgu.shape
    I = wd.shape[1]
    V = wh.shape[1]

    tm = _pick_tm(M)
    # TODO(synk): for general M not divisible by the tile, pad/mask with a cdiv grid.
    assert M % tm == 0 and tm % 16 == 0

    kernel = functools.partial(_fused_model_kernel,
                               n_layers=L, inter=I2 // 2, eps=EPS)
    return pl.pallas_call(
        kernel,
        out_shape=jax.ShapeDtypeStruct((M, V), jnp.float32),
        grid_spec=pltpu.PrefetchScalarGridSpec(
            num_scalar_prefetch=0,
            grid=(M // tm,),
            in_specs=[
                pl.BlockSpec((tm, 1), lambda i: (i, 0)),          # token ids
                pl.BlockSpec((tm, 1), lambda i: (i, 0)),          # position ids
                pl.BlockSpec((VOC, H), lambda i: (0, 0)),         # token table (f32)
                pl.BlockSpec((P, H), lambda i: (0, 0)),           # position table (f32)
                pl.BlockSpec((L, 1, H), lambda i: (0, 0, 0)),     # per-layer norm gamma
                pl.BlockSpec((L, H, I2), lambda i: (0, 0, 0)),    # gate|up (bf16)
                pl.BlockSpec((L, I, H), lambda i: (0, 0, 0)),     # down (bf16)
                pl.BlockSpec((H, V), lambda i: (0, 0)),           # head W, ln_f folded (bf16)
                pl.BlockSpec((1, V), lambda i: (0, 0)),           # head bias (f32)
            ],
            out_specs=pl.BlockSpec((tm, V), lambda i: (i, 0)),
        ),
        compiler_params=pltpu.CompilerParams(
            dimension_semantics=("parallel",)),
    )(ids2d, pid2d, emb, pos, norm_w, wgu, wd, wh, bh)


# ----------------------------- model wrapper ---------------------------------
def init_params(key):
    """Deterministic synthetic parameters (shapes follow the PyTorch module)."""
    keys = jax.random.split(key, 7)
    scale = 0.02
    wg = scale * jax.random.normal(keys[4], (N_LAYERS, HIDDEN, INTER), jnp.float32)
    wu = scale * jax.random.normal(keys[5], (N_LAYERS, HIDDEN, INTER), jnp.float32)
    wd = scale * jax.random.normal(keys[6], (N_LAYERS, INTER, HIDDEN), jnp.float32)
    wh = scale * jax.random.normal(keys[2], (HIDDEN, VOCAB), jnp.float32)
    ln_f = jnp.ones((HIDDEN,), jnp.float32)        # torch RMSNorm init: ones
    params = {
        # nn.Embedding(vocab, hidden), nn.Embedding(max_pos, hidden)
        "emb": scale * jax.random.normal(keys[0], (VOCAB, HIDDEN), jnp.float32),
        "pos": scale * jax.random.normal(keys[1], (MAX_POS, HIDDEN), jnp.float32),
        # per-layer post_attention_norm weights (torch init: ones), stacked
        "norm": jnp.ones((N_LAYERS, 1, HIDDEN), jnp.float32),
        # fused gate|up projections and down projection, stored transposed,
        # bf16 for halved weight DMA and full-rate bf16 MXU
        "wgu": jnp.concatenate([wg, wu], axis=-1).astype(jnp.bfloat16),
        "wd": wd.astype(jnp.bfloat16),
        # final RMSNorm weight (used by the reference; folded into wh_k below)
        "ln_f": ln_f,
        # nn.Linear(hidden, vocab) head: f32 (H, V) for the reference, and the
        # kernel copy with ln_f gamma folded into the rows, bf16
        "wh": wh,
        "wh_k": (ln_f[:, None] * wh).astype(jnp.bfloat16),
        "bh": scale * jax.random.normal(keys[3], (1, VOCAB), jnp.float32),
    }
    return params


def vishwamai_forward(params, input_ids):
    B, S = input_ids.shape
    M = B * S
    ids2d = input_ids.reshape(M, 1).astype(jnp.int32)
    # position_ids = arange(S) broadcast over batch (static, no table gather here;
    # the actual embedding-row gathers happen inside the kernel).
    pid2d = jnp.tile(jnp.arange(S, dtype=jnp.int32), B).reshape(M, 1)

    # NOTE: VishwamaiAttention.forward returns None in the reference, so the
    # attention residual is skipped exactly as in PyTorch.
    # TODO(synk): RotaryEmbedding.forward is also `pass` in the reference — nothing to port.
    logits2d = pallas_model(ids2d, pid2d, params["emb"], params["pos"],
                            params["norm"], params["wgu"], params["wd"],
                            params["wh_k"], params["bh"])
    return logits2d.reshape(B, S, VOCAB)


# --------------------------- pure-JAX reference -------------------------------
def _rmsnorm_ref(x, w):
    return x * jax.lax.rsqrt(jnp.mean(x * x, axis=-1, keepdims=True) + EPS) * w


def reference_forward(params, input_ids):
    B, S = input_ids.shape
    positions = jnp.arange(S, dtype=jnp.int32)
    h = params["emb"][input_ids] + params["pos"][positions][None, :, :]
    for l in range(N_LAYERS):
        nh = _rmsnorm_ref(h, params["norm"][l, 0])
        gu = nh @ params["wgu"][l].astype(jnp.float32)
        g, u = gu[..., :INTER], gu[..., INTER:]
        h = h + (jax.nn.silu(g) * u) @ params["wd"][l].astype(jnp.float32)
    h = _rmsnorm_ref(h, params["ln_f"])
    return h @ params["wh"] + params["bh"][0]


# ------------------------------------ main ------------------------------------
if __name__ == "__main__":
    key = jax.random.PRNGKey(0)
    pkey, ikey = jax.random.split(key)
    params = init_params(pkey)
    input_ids = jax.random.randint(ikey, (BATCH, SEQ), 0, VOCAB, dtype=jnp.int32)

    logits = vishwamai_forward(params, input_ids)
    logits = jax.block_until_ready(logits)

    ref = reference_forward(params, input_ids)
    assert logits.shape == (BATCH, SEQ, VOCAB)
    # bf16 weights / bf16 activation casts at the MXU boundary -> loosened tolerance.
    assert jnp.allclose(logits, ref, rtol=2e-2, atol=2e-2), "mismatch vs reference"

    print("KERNEL_OK")
</pallas_src>

<mosaic_0001>
module attributes {stable_mosaic.version = 11 : i64} {
  func.func @_fused_model_kernel(%arg0: i32, %arg1: memref<16x1xi32, #tpu.memory_space<vmem>>, %arg2: memref<16x1xi32, #tpu.memory_space<vmem>>, %arg3: memref<256x128xf32, #tpu.memory_space<vmem>>, %arg4: memref<32x128xf32, #tpu.memory_space<vmem>>, %arg5: memref<2x1x128xf32, #tpu.memory_space<vmem>>, %arg6: memref<2x128x512xbf16, #tpu.memory_space<vmem>>, %arg7: memref<2x256x128xbf16, #tpu.memory_space<vmem>>, %arg8: memref<128x256xbf16, #tpu.memory_space<vmem>>, %arg9: memref<1x256xf32, #tpu.memory_space<vmem>>, %arg10: memref<16x256xf32, #tpu.memory_space<vmem>>) attributes {dimension_semantics = [#tpu.dimension_semantics<parallel>], iteration_bounds = array<i64: 1>, scalar_prefetch = 0 : i64, scratch_operands = 0 : i64, tpu.core_type = #tpu.core_type<tc>, window_params = [{transform_indices = @transform_0, window_bounds = array<i64: 16, 1>}, {transform_indices = @transform_1, window_bounds = array<i64: 16, 1>}, {pipeline_mode = #tpu.pipeline_mode<synchronous>, transform_indices = @transform_2, window_bounds = array<i64: 256, 128>}, {pipeline_mode = #tpu.pipeline_mode<synchronous>, transform_indices = @transform_3, window_bounds = array<i64: 32, 128>}, {pipeline_mode = #tpu.pipeline_mode<synchronous>, transform_indices = @transform_4, window_bounds = array<i64: 2, 1, 128>}, {pipeline_mode = #tpu.pipeline_mode<synchronous>, transform_indices = @transform_5, window_bounds = array<i64: 2, 128, 512>}, {pipeline_mode = #tpu.pipeline_mode<synchronous>, transform_indices = @transform_6, window_bounds = array<i64: 2, 256, 128>}, {pipeline_mode = #tpu.pipeline_mode<synchronous>, transform_indices = @transform_7, window_bounds = array<i64: 128, 256>}, {pipeline_mode = #tpu.pipeline_mode<synchronous>, transform_indices = @transform_8, window_bounds = array<i64: 1, 256>}, {transform_indices = @transform_9, window_bounds = array<i64: 16, 256>}]} {
    %c0 = arith.constant 0 : index
    %c0_0 = arith.constant 0 : index
    %0 = vector.load %arg1[%c0, %c0_0] : memref<16x1xi32, #tpu.memory_space<vmem>>, vector<16x1xi32>
    %c0_1 = arith.constant 0 : index
    %c0_2 = arith.constant 0 : index
    %1 = vector.load %arg2[%c0_1, %c0_2] : memref<16x1xi32, #tpu.memory_space<vmem>>, vector<16x1xi32>
    %2 = tpu.iota {dimensions = array<i32: 1>} : vector<16x256xi32>
    %3 = vector.broadcast %0 : vector<16x1xi32> to vector<16x256xi32>
    %4 = arith.cmpi eq, %3, %2 : vector<16x256xi32>
    %5 = arith.extui %4 : vector<16x256xi1> to vector<16x256xi32>
    %6 = arith.sitofp %5 : vector<16x256xi32> to vector<16x256xf32>
    %7 = tpu.iota {dimensions = array<i32: 1>} : vector<16x32xi32>
    %8 = vector.broadcast %1 : vector<16x1xi32> to vector<16x32xi32>
    %9 = arith.cmpi eq, %8, %7 : vector<16x32xi32>
    %10 = arith.extui %9 : vector<16x32xi1> to vector<16x32xi32>
    %11 = arith.sitofp %10 : vector<16x32xi32> to vector<16x32xf32>
    %c0_3 = arith.constant 0 : index
    %c0_4 = arith.constant 0 : index
    %12 = vector.load %arg3[%c0_3, %c0_4] : memref<256x128xf32, #tpu.memory_space<vmem>>, vector<256x128xf32>
    %cst = arith.constant dense<0.000000e+00> : vector<16x128xf32>
    %13 = tpu.matmul %6, %12, %cst {dimension_numbers = #tpu.dot_dimension_numbers<[1], [0], [0], [1], [0, 0, 1, 1], [], []>} : vector<16x256xf32>, vector<256x128xf32>, vector<16x128xf32> -> vector<16x128xf32>
    %c0_5 = arith.constant 0 : index
    %c0_6 = arith.constant 0 : index
    %14 = vector.load %arg4[%c0_5, %c0_6] : memref<32x128xf32, #tpu.memory_space<vmem>>, vector<32x128xf32>
    %cst_7 = arith.constant dense<0.000000e+00> : vector<16x128xf32>
    %15 = tpu.matmul %11, %14, %cst_7 {dimension_numbers = #tpu.dot_dimension_numbers<[1], [0], [0], [1], [0, 0, 1, 1], [], []>} : vector<16x32xf32>, vector<32x128xf32>, vector<16x128xf32> -> vector<16x128xf32>
    %16 = arith.addf %13, %15 : vector<16x128xf32>
    %17 = arith.mulf %16, %16 : vector<16x128xf32>
    %cst_8 = arith.constant dense<0.000000e+00> : vector<16xf32>
    %18 = vector.multi_reduction <add>, %17, %cst_8 [1] : vector<16x128xf32> to vector<16xf32>
    %19 = vector.shape_cast %18 : vector<16xf32> to vector<16x1xf32>
    %cst_9 = arith.constant 1.280000e+02 : f32
    %20 = vector.broadcast %cst_9 : f32 to vector<16x1xf32>
    %21 = arith.divf %19, %20 : vector<16x1xf32>
    %cst_10 = arith.constant 9.99999974E-6 : f32
    %22 = vector.broadcast %cst_10 : f32 to vector<16x1xf32>
    %23 = arith.addf %21, %22 : vector<16x1xf32>
    %24 = math.rsqrt %23 : vector<16x1xf32>
    %25 = vector.broadcast %24 : vector<16x1xf32> to vector<16x128xf32>
    %26 = arith.mulf %16, %25 : vector<16x128xf32>
    %c0_11 = arith.constant 0 : index
    %c0_12 = arith.constant 0 : index
    %c0_13 = arith.constant 0 : index
    %27 = vector.load %arg5[%c0_11, %c0_12, %c0_13] : memref<2x1x128xf32, #tpu.memory_space<vmem>>, vector<1x1x128xf32>
    %28 = vector.shape_cast %27 : vector<1x1x128xf32> to vector<1x128xf32>
    %29 = vector.broadcast %28 : vector<1x128xf32> to vector<16x128xf32>
    %30 = arith.mulf %26, %29 : vector<16x128xf32>
    %31 = arith.truncf %30 : vector<16x128xf32> to vector<16x128xbf16>
    %c0_14 = arith.constant 0 : index
    %c0_15 = arith.constant 0 : index
    %c0_16 = arith.constant 0 : index
    %32 = vector.load %arg6[%c0_14, %c0_15, %c0_16] : memref<2x128x512xbf16, #tpu.memory_space<vmem>>, vector<1x128x512xbf16>
    %33 = vector.shape_cast %32 : vector<1x128x512xbf16> to vector<128x512xbf16>
    %cst_17 = arith.constant dense<0.000000e+00> : vector<16x512xf32>
    %34 = tpu.matmul %31, %33, %cst_17 {dimension_numbers = #tpu.dot_dimension_numbers<[1], [0], [0], [1], [0, 0, 1, 1], [], []>} : vector<16x128xbf16>, vector<128x512xbf16>, vector<16x512xf32> -> vector<16x512xf32>
    %35 = vector.extract_strided_slice %34 {offsets = [0, 0], sizes = [16, 256], strides = [1, 1]} : vector<16x512xf32> to vector<16x256xf32>
    %36 = vector.extract_strided_slice %34 {offsets = [0, 256], sizes = [16, 256], strides = [1, 1]} : vector<16x512xf32> to vector<16x256xf32>
    %37 = arith.negf %35 : vector<16x256xf32>
    %38 = math.exp %37 : vector<16x256xf32>
    %cst_18 = arith.constant 1.000000e+00 : f32
    %39 = vector.broadcast %cst_18 : f32 to vector<16x256xf32>
    %40 = arith.addf %39, %38 : vector<16x256xf32>
    %41 = arith.divf %39, %40 : vector<16x256xf32>
    %42 = arith.mulf %35, %41 : vector<16x256xf32>
    %43 = arith.mulf %42, %36 : vector<16x256xf32>
    %44 = arith.truncf %43 : vector<16x256xf32> to vector<16x256xbf16>
    %c0_19 = arith.constant 0 : index
    %c0_20 = arith.constant 0 : index
    %c0_21 = arith.constant 0 : index
    %45 = vector.load %arg7[%c0_19, %c0_20, %c0_21] : memref<2x256x128xbf16, #tpu.memory_space<vmem>>, vector<1x256x128xbf16>
    %46 = vector.shape_cast %45 : vector<1x256x128xbf16> to vector<256x128xbf16>
    %cst_22 = arith.constant dense<0.000000e+00> : vector<16x128xf32>
    %47 = tpu.matmul %44, %46, %cst_22 {dimension_numbers = #tpu.dot_dimension_numbers<[1], [0], [0], [1], [0, 0, 1, 1], [], []>} : vector<16x256xbf16>, vector<256x128xbf16>, vector<16x128xf32> -> vector<16x128xf32>
    %48 = arith.addf %16, %47 : vector<16x128xf32>
    %49 = arith.mulf %48, %48 : vector<16x128xf32>
    %cst_23 = arith.constant dense<0.000000e+00> : vector<16xf32>
    %50 = vector.multi_reduction <add>, %49, %cst_23 [1] : vector<16x128xf32> to vector<16xf32>
    %51 = vector.shape_cast %50 : vector<16xf32> to vector<16x1xf32>
    %cst_24 = arith.constant 1.280000e+02 : f32
    %52 = vector.broadcast %cst_24 : f32 to vector<16x1xf32>
    %53 = arith.divf %51, %52 : vector<16x1xf32>
    %cst_25 = arith.constant 9.99999974E-6 : f32
    %54 = vector.broadcast %cst_25 : f32 to vector<16x1xf32>
    %55 = arith.addf %53, %54 : vector<16x1xf32>
    %56 = math.rsqrt %55 : vector<16x1xf32>
    %57 = vector.broadcast %56 : vector<16x1xf32> to vector<16x128xf32>
    %58 = arith.mulf %48, %57 : vector<16x128xf32>
    %c1 = arith.constant 1 : index
    %c0_26 = arith.constant 0 : index
    %c0_27 = arith.constant 0 : index
    %59 = vector.load %arg5[%c1, %c0_26, %c0_27] : memref<2x1x128xf32, #tpu.memory_space<vmem>>, vector<1x1x128xf32>
    %60 = vector.shape_cast %59 : vector<1x1x128xf32> to vector<1x128xf32>
    %61 = vector.broadcast %60 : vector<1x128xf32> to vector<16x128xf32>
    %62 = arith.mulf %58, %61 : vector<16x128xf32>
    %63 = arith.truncf %62 : vector<16x128xf32> to vector<16x128xbf16>
    %c1_28 = arith.constant 1 : index
    %c0_29 = arith.constant 0 : index
    %c0_30 = arith.constant 0 : index
    %64 = vector.load %arg6[%c1_28, %c0_29, %c0_30] : memref<2x128x512xbf16, #tpu.memory_space<vmem>>, vector<1x128x512xbf16>
    %65 = vector.shape_cast %64 : vector<1x128x512xbf16> to vector<128x512xbf16>
    %cst_31 = arith.constant dense<0.000000e+00> : vector<16x512xf32>
    %66 = tpu.matmul %63, %65, %cst_31 {dimension_numbers = #tpu.dot_dimension_numbers<[1], [0], [0], [1], [0, 0, 1, 1], [], []>} : vector<16x128xbf16>, vector<128x512xbf16>, vector<16x512xf32> -> vector<16x512xf32>
    %67 = vector.extract_strided_slice %66 {offsets = [0, 0], sizes = [16, 256], strides = [1, 1]} : vector<16x512xf32> to vector<16x256xf32>
    %68 = vector.extract_strided_slice %66 {offsets = [0, 256], sizes = [16, 256], strides = [1, 1]} : vector<16x512xf32> to vector<16x256xf32>
    %69 = arith.negf %67 : vector<16x256xf32>
    %70 = math.exp %69 : vector<16x256xf32>
    %cst_32 = arith.constant 1.000000e+00 : f32
    %71 = vector.broadcast %cst_32 : f32 to vector<16x256xf32>
    %72 = arith.addf %71, %70 : vector<16x256xf32>
    %73 = arith.divf %71, %72 : vector<16x256xf32>
    %74 = arith.mulf %67, %73 : vector<16x256xf32>
    %75 = arith.mulf %74, %68 : vector<16x256xf32>
    %76 = arith.truncf %75 : vector<16x256xf32> to vector<16x256xbf16>
    %c1_33 = arith.constant 1 : index
    %c0_34 = arith.constant 0 : index
    %c0_35 = arith.constant 0 : index
    %77 = vector.load %arg7[%c1_33, %c0_34, %c0_35] : memref<2x256x128xbf16, #tpu.memory_space<vmem>>, vector<1x256x128xbf16>
    %78 = vector.shape_cast %77 : vector<1x256x128xbf16> to vector<256x128xbf16>
    %cst_36 = arith.constant dense<0.000000e+00> : vector<16x128xf32>
    %79 = tpu.matmul %76, %78, %cst_36 {dimension_numbers = #tpu.dot_dimension_numbers<[1], [0], [0], [1], [0, 0, 1, 1], [], []>} : vector<16x256xbf16>, vector<256x128xbf16>, vector<16x128xf32> -> vector<16x128xf32>
    %80 = arith.addf %48, %79 : vector<16x128xf32>
    %81 = arith.mulf %80, %80 : vector<16x128xf32>
    %cst_37 = arith.constant dense<0.000000e+00> : vector<16xf32>
    %82 = vector.multi_reduction <add>, %81, %cst_37 [1] : vector<16x128xf32> to vector<16xf32>
    %83 = vector.shape_cast %82 : vector<16xf32> to vector<16x1xf32>
    %cst_38 = arith.constant 1.280000e+02 : f32
    %84 = vector.broadcast %cst_38 : f32 to vector<16x1xf32>
    %85 = arith.divf %83, %84 : vector<16x1xf32>
    %cst_39 = arith.constant 9.99999974E-6 : f32
    %86 = vector.broadcast %cst_39 : f32 to vector<16x1xf32>
    %87 = arith.addf %85, %86 : vector<16x1xf32>
    %88 = math.rsqrt %87 : vector<16x1xf32>
    %89 = vector.broadcast %88 : vector<16x1xf32> to vector<16x128xf32>
    %90 = arith.mulf %80, %89 : vector<16x128xf32>
    %91 = arith.truncf %90 : vector<16x128xf32> to vector<16x128xbf16>
    %c0_40 = arith.constant 0 : index
    %c0_41 = arith.constant 0 : index
    %92 = vector.load %arg8[%c0_40, %c0_41] : memref<128x256xbf16, #tpu.memory_space<vmem>>, vector<128x256xbf16>
    %cst_42 = arith.constant dense<0.000000e+00> : vector<16x256xf32>
    %93 = tpu.matmul %91, %92, %cst_42 {dimension_numbers = #tpu.dot_dimension_numbers<[1], [0], [0], [1], [0, 0, 1, 1], [], []>} : vector<16x128xbf16>, vector<128x256xbf16>, vector<16x256xf32> -> vector<16x256xf32>
    %c0_43 = arith.constant 0 : index
    %c0_44 = arith.constant 0 : index
    %94 = vector.load %arg9[%c0_43, %c0_44] : memref<1x256xf32, #tpu.memory_space<vmem>>, vector<1x256xf32>
    %95 = vector.broadcast %94 : vector<1x256xf32> to vector<16x256xf32>
    %96 = arith.addf %93, %95 : vector<16x256xf32>
    %c0_45 = arith.constant 0 : index
    %c0_46 = arith.constant 0 : index
    %97 = vector.load %arg10[%c0_45, %c0_46] : memref<16x256xf32, #tpu.memory_space<vmem>>, vector<16x256xf32>
    tpu.vector_store %arg10[%c0_45, %c0_46], %96 {strides = array<i32>} : memref<16x256xf32, #tpu.memory_space<vmem>>, vector<16x256xf32>,
    return
  }
  func.func @transform_0(%arg0: i32) -> (i32, i32) {
    %c0_i32 = arith.constant 0 : i32
    %c0_i32_0 = arith.constant 0 : i32
    return %arg0, %c0_i32 : i32, i32
  }
  func.func @transform_1(%arg0: i32) -> (i32, i32) {
    %c0_i32 = arith.constant 0 : i32
    %c0_i32_0 = arith.constant 0 : i32
    return %arg0, %c0_i32 : i32, i32
  }
  func.func @transform_2(%arg0: i32) -> (i32, i32) {
    %c0_i32 = arith.constant 0 : i32
    %c0_i32_0 = arith.constant 0 : i32
    %c0_i32_1 = arith.constant 0 : i32
    return %c0_i32, %c0_i32_0 : i32, i32
  }
  func.func @transform_3(%arg0: i32) -> (i32, i32) {
    %c0_i32 = arith.constant 0 : i32
    %c0_i32_0 = arith.constant 0 : i32
    %c0_i32_1 = arith.constant 0 : i32
    return %c0_i32, %c0_i32_0 : i32, i32
  }
  func.func @transform_4(%arg0: i32) -> (i32, i32, i32) {
    %c0_i32 = arith.constant 0 : i32
    %c0_i32_0 = arith.constant 0 : i32
    %c0_i32_1 = arith.constant 0 : i32
    %c0_i32_2 = arith.constant 0 : i32
    return %c0_i32, %c0_i32_0, %c0_i32_1 : i32, i32, i32
  }
  func.func @transform_5(%arg0: i32) -> (i32, i32, i32) {
    %c0_i32 = arith.constant 0 : i32
    %c0_i32_0 = arith.constant 0 : i32
    %c0_i32_1 = arith.constant 0 : i32
    %c0_i32_2 = arith.constant 0 : i32
    return %c0_i32, %c0_i32_0, %c0_i32_1 : i32, i32, i32
  }
  func.func @transform_6(%arg0: i32) -> (i32, i32, i32) {
    %c0_i32 = arith.constant 0 : i32
    %c0_i32_0 = arith.constant 0 : i32
    %c0_i32_1 = arith.constant 0 : i32
    %c0_i32_2 = arith.constant 0 : i32
    return %c0_i32, %c0_i32_0, %c0_i32_1 : i32, i32, i32
  }
  func.func @transform_7(%arg0: i32) -> (i32, i32) {
    %c0_i32 = arith.constant 0 : i32
    %c0_i32_0 = arith.constant 0 : i32
    %c0_i32_1 = arith.constant 0 : i32
    return %c0_i32, %c0_i32_0 : i32, i32
  }
  func.func @transform_8(%arg0: i32) -> (i32, i32) {
    %c0_i32 = arith.constant 0 : i32
    %c0_i32_0 = arith.constant 0 : i32
    %c0_i32_1 = arith.constant 0 : i32
    return %c0_i32, %c0_i32_0 : i32, i32
  }
  func.func @transform_9(%arg0: i32) -> (i32, i32) {
    %c0_i32 = arith.constant 0 : i32
    %c0_i32_0 = arith.constant 0 : i32
    return %arg0, %c0_i32 : i32, i32
  }
}

</mosaic_0001>

<llo_original>
// kernel: tpu_custom_call.1
$region0: #{tpu_custom_call.1}
  #allocation0 [shape = 'u32[]', space=smem, size = 0x4, offset = 0x4, fixed_abs, tag = 'smem constant byte address 0x4 - core index']
  #allocation1 [shape = 'u32[72,128]{1,0:T(1,128)}', space=vmem, size = 0x9000, scoped, tag = 'internal scratch']
  %s0 = inlined_call_operand.vmem [shape: s32[16,1], index: 0, kind: input, shape index: {}]
  %s1 = inlined_call_operand.vmem [shape: s32[16,1], index: 1, kind: input, shape index: {}]
  %s2 = inlined_call_operand.hbm [shape: f32[256,128], index: 2, kind: input, shape index: {}]
  %s3 = inlined_call_operand.vmem [shape: f32[32,128], index: 3, kind: input, shape index: {}]
  %s4 = inlined_call_operand.vmem [shape: f32[2,1,128], index: 4, kind: input, shape index: {}]
  %s5 = inlined_call_operand.hbm [shape: bf16[2,128,512], index: 5, kind: input, shape index: {}]
  %s6 = inlined_call_operand.hbm [shape: bf16[2,256,128], index: 6, kind: input, shape index: {}]
  %s7 = inlined_call_operand.hbm [shape: bf16[128,256], index: 7, kind: input, shape index: {}]
  %s8 = inlined_call_operand.vmem [shape: f32[1,256], index: 8, kind: input, shape index: {}]
  %s9 = inlined_call_operand.hbm [shape: f32[16,256], index: 9, kind: output, shape index: {}]
  %s10 = sld [smem:[#allocation0]]
  $region62: #{tpu_custom_call.1} parent=0
    _
  %s12 = ssub.s32 1, %s10
  %s13 = scalar_select 0, %s12, %s10
  $region1: #{tpu_custom_call.1} parent=0
    #allocation2 [shape = 'u8[131072]{0}', space=vmem, size = 0x20000, scoped, tag = 'input window, operand 2, single buffered']
    #allocation3 [shape = 's32[1]{0}', space=sflag, size = 0x4, scoped, tag = 'scoped memory for tpu_custom_call.1']
    #allocation4 [shape = 's32[1]{0}', space=sflag, size = 0x4, scoped, tag = 'scoped memory for tpu_custom_call.1']
    #allocation5 [shape = 'u8[262144]{0}', space=vmem, size = 0x40000, scoped, tag = 'input window, operand 5, single buffered']
    #allocation6 [shape = 's32[1]{0}', space=sflag, size = 0x4, scoped, tag = 'scoped memory for tpu_custom_call.1']
    #allocation7 [shape = 'u8[131072]{0}', space=vmem, size = 0x20000, scoped, tag = 'input window, operand 6, single buffered']
    #allocation8 [shape = 'u8[65536]{0}', space=vmem, size = 0x10000, scoped, tag = 'input window, operand 7, single buffered']
    #allocation9 [shape = 's32[1]{0}', space=sflag, size = 0x4, scoped, tag = 'scoped memory for tpu_custom_call.1']
    #allocation10 [shape = 'u8[16384]{0}', space=vmem, size = 0x4000, scoped, tag = 'output window, operand 0, single buffered']
    %14 = vsyncpa [#allocation3], 0
    %15 = vsyncpa [#allocation6], 0
    %16 = vsyncpa [#allocation9], 0
    %17 = vsyncpa [#allocation4], 0
    // Predicated region
    $region2: #{tpu_custom_call.1} parent=1 // pred_check
      _
    $region3: #{tpu_custom_call.1} parent=1 // pred_check_branch
      %19 = sbr.rel (0) target = $region5
    $region4: #{tpu_custom_call.1} parent=1 // pred_region
      _
    $region5: #{tpu_custom_call.1} parent=1 // pred_fallthru
      _
    // Predicated region
    $region6: #{tpu_custom_call.1} parent=1 // pred_check
      _
    $region7: #{tpu_custom_call.1} parent=1 // pred_check_branch
      %21 = sbr.rel (0) target = $region9
    $region8: #{tpu_custom_call.1} parent=1 // pred_region
      _
    $region9: #{tpu_custom_call.1} parent=1 // pred_fallthru
      _
    // Predicated region
    $region10: #{tpu_custom_call.1} parent=1 // pred_check
      _
    $region11: #{tpu_custom_call.1} parent=1 // pred_check_branch
      %23 = sbr.rel (0) target = $region13
    $region12: #{tpu_custom_call.1} parent=1 // pred_region
      %25 = vsyncadd [#allocation3], 0
      %s26 = sshll.u32 %s2, 4
      %s27 = int_to_ptr.hbm [resolvable:$true] %s26
      %s28 = sshll.u32 [#allocation2], 4
      %s29 = int_to_ptr.vmem [resolvable:$true] %s28
      %34 = dma.hbm_to_vmem [thread:$0]  %s27, 4096, %s29, [#allocation3], 128, 128, 8
    $region13: #{tpu_custom_call.1} parent=1 // pred_fallthru
      _
    // Predicated region
    $region14: #{tpu_custom_call.1} parent=1 // pred_check
      _
    $region15: #{tpu_custom_call.1} parent=1 // pred_check_branch
      %36 = sbr.rel (0) target = $region17
    $region16: #{tpu_custom_call.1} parent=1 // pred_region
      _
    $region17: #{tpu_custom_call.1} parent=1 // pred_fallthru
      _
    // Predicated region
    $region18: #{tpu_custom_call.1} parent=1 // pred_check
      _
    $region19: #{tpu_custom_call.1} parent=1 // pred_check_branch
      %38 = sbr.rel (0) target = $region21
    $region20: #{tpu_custom_call.1} parent=1 // pred_region
      _
    $region21: #{tpu_custom_call.1} parent=1 // pred_fallthru
      _
    // Predicated region
    $region22: #{tpu_custom_call.1} parent=1 // pred_check
      _
    $region23: #{tpu_custom_call.1} parent=1 // pred_check_branch
      %40 = sbr.rel (0) target = $region25
    $region24: #{tpu_custom_call.1} parent=1 // pred_region
      %42 = vsyncadd [#allocation6], 0
      %s43 = sshll.u32 %s5, 4
      %s44 = int_to_ptr.hbm [resolvable:$true] %s43
      %s45 = sshll.u32 [#allocation5], 4
      %s46 = int_to_ptr.vmem [resolvable:$true] %s45
      %51 = dma.hbm_to_vmem [thread:$0]  %s44, 8192, %s46, [#allocation6], 256, 256, 16
    $region25: #{tpu_custom_call.1} parent=1 // pred_fallthru
      _
    // Predicated region
    $region26: #{tpu_custom_call.1} parent=1 // pred_check
      _
    $region27: #{tpu_custom_call.1} parent=1 // pred_check_branch
      %53 = sbr.rel (0) target = $region29
    $region28: #{tpu_custom_call.1} parent=1 // pred_region
      %55 = vsyncadd [#allocation6], 0
      %s56 = sshll.u32 %s6, 4
      %s57 = int_to_ptr.hbm [resolvable:$true] %s56
      %s58 = sshll.u32 [#allocation7], 4
      %s59 = int_to_ptr.vmem [resolvable:$true] %s58
      %64 = dma.hbm_to_vmem [thread:$0]  %s57, 4096, %s59, [#allocation6], 64, 64, 4
    $region29: #{tpu_custom_call.1} parent=1 // pred_fallthru
      _
    // Predicated region
    $region30: #{tpu_custom_call.1} parent=1 // pred_check
      _
    $region31: #{tpu_custom_call.1} parent=1 // pred_check_branch
      %66 = sbr.rel (0) target = $region33
    $region32: #{tpu_custom_call.1} parent=1 // pred_region
      %68 = vsyncadd [#allocation9], 0
      %s69 = sshll.u32 %s7, 4
      %s70 = int_to_ptr.hbm [resolvable:$true] %s69
      %s71 = sshll.u32 [#allocation8], 4
      %s72 = int_to_ptr.vmem [resolvable:$true] %s71
      %77 = dma.hbm_to_vmem [thread:$0]  %s70, 2048, %s72, [#allocation9], 128, 128, 8
    $region33: #{tpu_custom_call.1} parent=1 // pred_fallthru
      _
    // Predicated region
    $region34: #{tpu_custom_call.1} parent=1 // pred_check
      _
    $region35: #{tpu_custom_call.1} parent=1 // pred_check_branch
      %79 = sbr.rel (0) target = $region37
    $region36: #{tpu_custom_call.1} parent=1 // pred_region
      _
    $region37: #{tpu_custom_call.1} parent=1 // pred_fallthru
      _
    // Predicated region
    $region38: #{tpu_custom_call.1} parent=1 // pred_check
      _
    $region39: #{tpu_custom_call.1} parent=1 // pred_check_branch
      %81 = sbr.rel (0) target = $region41
    $region40: #{tpu_custom_call.1} parent=1 // pred_region
      %83 = dma.done [#allocation3], 4096
    $region41: #{tpu_custom_call.1} parent=1 // pred_fallthru
      _
    // Predicated region
    $region42: #{tpu_custom_call.1} parent=1 // pred_check
      _
    $region43: #{tpu_custom_call.1} parent=1 // pred_check_branch
      %85 = sbr.rel (0) target = $region45
    $region44: #{tpu_custom_call.1} parent=1 // pred_region
      %87 = dma.done [#allocation6], 8192
    $region45: #{tpu_custom_call.1} parent=1 // pred_fallthru
      _
    // Predicated region
    $region46: #{tpu_custom_call.1} parent=1 // pred_check
      _
    $region47: #{tpu_custom_call.1} parent=1 // pred_check_branch
      %89 = sbr.rel (0) target = $region49
    $region48: #{tpu_custom_call.1} parent=1 // pred_region
      %91 = dma.done [#allocation6], 4096
    $region49: #{tpu_custom_call.1} parent=1 // pred_fallthru
      _
    // Predicated region
    $region50: #{tpu_custom_call.1} parent=1 // pred_check
      _
    $region51: #{tpu_custom_call.1} parent=1 // pred_check_branch
      %93 = sbr.rel (0) target = $region53
    $region52: #{tpu_custom_call.1} parent=1 // pred_region
      %95 = dma.done [#allocation9], 2048
    $region53: #{tpu_custom_call.1} parent=1 // pred_fallthru
      _
    %v96 = vld [vmem:[%s0] sm:$0xff]
    %v97 = vld [vmem:[%s0 + $0x8] sm:$0xff]
    %v98 = vld [vmem:[%s1] sm:$0xff]
    %v99 = vld [vmem:[%s1 + $0x8] sm:$0xff]
    %v100 = vlaneseq
    %v101 = vand.u32 %v100, 127
    %v102 = vadd.s32 %v101, 128
    %103 = vset.pattern.permute.xlu0 0
    %104 = vperm.xlu0 %103, %v96
    %v105 = vpop.permute.xlu0 %104
    %106 = vset.pattern.permute.xlu0 0
    %107 = vperm.xlu0 %106, %v97
    %v108 = vpop.permute.xlu0 %107
    %vm109 = vcmp.eq.s32.totalorder %v105, %v101
    %vm110 = vcmp.eq.s32.totalorder %v105, %v102
    %vm111 = vcmp.eq.s32.totalorder %v108, %v101
    %vm112 = vcmp.eq.s32.totalorder %v108, %v102
    %v113 = vsel %vm109, 1, 0
    %v114 = vsel %vm110, 1, 0
    %v115 = vsel %vm111, 1, 0
    %v116 = vsel %vm112, 1, 0
    %v117 = vcvt.s32.f32 %v113
    %v118 = vcvt.s32.f32 %v114
    %v119 = vcvt.s32.f32 %v115
    %v120 = vcvt.s32.f32 %v116
    %121 = vset.pattern.permute.xlu0 0
    %122 = vperm.xlu0 %121, %v98
    %v123 = vpop.permute.xlu0 %122
    %124 = vset.pattern.permute.xlu0 0
    %125 = vperm.xlu0 %124, %v99
    %v126 = vpop.permute.xlu0 %125
    %vm127 = vcmp.eq.s32.totalorder %v123, %v101
    %vm128 = vcmp.eq.s32.totalorder %v126, %v101
    %v129 = vsel %vm127, 1, 0
    %v130 = vsel %vm128, 1, 0
    %v131 = vcvt.s32.f32 %v129
    %v132 = vcvt.s32.f32 %v130
    %v133 = vld [vmem:[#allocation2] sm:$0xff]
    %v134 = vld [vmem:[#allocation2 + $0x8] sm:$0xff]
    %v135 = vld [vmem:[#allocation2 + $0x10] sm:$0xff]
    %v136 = vld [vmem:[#allocation2 + $0x18] sm:$0xff]
    %v137 = vld [vmem:[#allocation2 + $0x20] sm:$0xff]
    %v138 = vld [vmem:[#allocation2 + $0x28] sm:$0xff]
    %v139 = vld [vmem:[#allocation2 + $0x30] sm:$0xff]
    %v140 = vld [vmem:[#allocation2 + $0x38] sm:$0xff]
    %v141 = vld [vmem:[#allocation2 + $0x40] sm:$0xff]
    %v142 = vld [vmem:[#allocation2 + $0x48] sm:$0xff]
    %v143 = vld [vmem:[#allocation2 + $0x50] sm:$0xff]
    %v144 = vld [vmem:[#allocation2 + $0x58] sm:$0xff]
    %v145 = vld [vmem:[#allocation2 + $0x60] sm:$0xff]
    %v146 = vld [vmem:[#allocation2 + $0x68] sm:$0xff]
    %v147 = vld [vmem:[#allocation2 + $0x70] sm:$0xff]
    %v148 = vld [vmem:[#allocation2 + $0x78] sm:$0xff]
    %v149 = vld [vmem:[#allocation2 + $0x80] sm:$0xff]
    %v150 = vld [vmem:[#allocation2 + $0x88] sm:$0xff]
    %v151 = vld [vmem:[#allocation2 + $0x90] sm:$0xff]
    %v152 = vld [vmem:[#allocation2 + $0x98] sm:$0xff]
    %v153 = vld [vmem:[#allocation2 + $0xa0] sm:$0xff]
    %v154 = vld [vmem:[#allocation2 + $0xa8] sm:$0xff]
    %v155 = vld [vmem:[#allocation2 + $0xb0] sm:$0xff]
    %v156 = vld [vmem:[#allocation2 + $0xb8] sm:$0xff]
    %v157 = vld [vmem:[#allocation2 + $0xc0] sm:$0xff]
    %v158 = vld [vmem:[#allocation2 + $0xc8] sm:$0xff]
    %v159 = vld [vmem:[#allocation2 + $0xd0] sm:$0xff]
    %v160 = vld [vmem:[#allocation2 + $0xd8] sm:$0xff]
    %v161 = vld [vmem:[#allocation2 + $0xe0] sm:$0xff]
    %v162 = vld [vmem:[#allocation2 + $0xe8] sm:$0xff]
    %v163 = vld [vmem:[#allocation2 + $0xf0] sm:$0xff]
    %v164 = vld [vmem:[#allocation2 + $0xf8] sm:$0xff]
    %v165 = vld [vmem:[%s3] sm:$0xff]
    %v166 = vld [vmem:[%s3 + $0x8] sm:$0xff]
    %v167 = vld [vmem:[%s3 + $0x10] sm:$0xff]
    %v168 = vld [vmem:[%s3 + $0x18] sm:$0xff]
    %vm169 = vcmask 261120
    %v171 = vsel %vm169, %v131, 0
    %v174 = vsel %vm169, %v132, 0
    %176 = vmatpush.msra.mxu0 0.0
    %177 = vmatpush.msra.mxu0 0.0
    %178 = vmatpush.msra.mxu0 0.0
    %179 = vmatpush.msra.mxu0 0.0
    %180 = vmatpush.msra.mxu0 0.0
    %181 = vmatpush.msra.mxu0 0.0
    %182 = vmatpush.msra.mxu0 0.0
    %183 = vmatpush.msra.mxu0 0.0
    %184 = vmatpush.msra.mxu0 0.0
    %185 = vmatpush.msra.mxu0 0.0
    %186 = vmatpush.msra.mxu0 0.0
    %187 = vmatpush.msra.mxu0 0.0
    %188 = vmatpush.msra.mxu0 %v168
    %189 = vmatpush.msra.mxu0 %v167
    %190 = vmatpush.msra.mxu0 %v166
    %191 = vmatpush.msra.mxu0 %v165
    %192 = vmatmul.f32.gmra.mxu0 %v171
    %v193 = vpop.f32.mrf.mxu0
    %v194 = vadd.f32 0.0, %v193
    %195 = vmatmul.f32.gmra.mxu0 %v174
    %v196 = vpop.f32.mrf.mxu0
    %v197 = vadd.f32 0.0, %v196
    %198 = vdwg.mxu0
    %199 = vmatpush.msra.mxu0 %v148
    %200 = vmatpush.msra.mxu0 %v147
    %201 = vmatpush.msra.mxu0 %v146
    %202 = vmatpush.msra.mxu0 %v145
    %203 = vmatpush.msra.mxu0 %v144
    %204 = vmatpush.msra.mxu0 %v143
    %205 = vmatpush.msra.mxu0 %v142
    %206 = vmatpush.msra.mxu0 %v141
    %207 = vmatpush.msra.mxu0 %v140
    %208 = vmatpush.msra.mxu0 %v139
    %209 = vmatpush.msra.mxu0 %v138
    %210 = vmatpush.msra.mxu0 %v137
    %211 = vmatpush.msra.mxu0 %v136
    %212 = vmatpush.msra.mxu0 %v135
    %213 = vmatpush.msra.mxu0 %v134
    %214 = vmatpush.msra.mxu0 %v133
    %215 = vmatmul.f32.gmra.mxu0 %v117
    %v216 = vpop.f32.mrf.mxu0
    %v217 = vadd.f32 %v194, %v216
    %218 = vmatmul.f32.gmra.mxu0 %v119
    %v219 = vpop.f32.mrf.mxu0
    %v220 = vadd.f32 %v197, %v219
    %221 = vdwg.mxu0
    %222 = vmatpush.msra.mxu0 %v164
    %223 = vmatpush.msra.mxu0 %v163
    %224 = vmatpush.msra.mxu0 %v162
    %225 = vmatpush.msra.mxu0 %v161
    %226 = vmatpush.msra.mxu0 %v160
    %227 = vmatpush.msra.mxu0 %v159
    %228 = vmatpush.msra.mxu0 %v158
    %229 = vmatpush.msra.mxu0 %v157
    %230 = vmatpush.msra.mxu0 %v156
    %231 = vmatpush.msra.mxu0 %v155
    %232 = vmatpush.msra.mxu0 %v154
    %233 = vmatpush.msra.mxu0 %v153
    %234 = vmatpush.msra.mxu0 %v152
    %235 = vmatpush.msra.mxu0 %v151
    %236 = vmatpush.msra.mxu0 %v150
    %237 = vmatpush.msra.mxu0 %v149
    %238 = vmatmul.f32.gmra.mxu0 %v118
    %v239 = vpop.f32.mrf.mxu0
    %v240 = vadd.f32 %v217, %v239
    %241 = vmatmul.f32.gmra.mxu0 %v120
    %v242 = vpop.f32.mrf.mxu0
    %v243 = vadd.f32 %v220, %v242
    %244 = vdwg.mxu0
    %v245 = vmul.f32 %v240, %v240
    %v246 = vmul.f32 %v243, %v243
    %247 = vadd.xlane.f32.xlu0 %v245
    %v248 = vpop.xlane.xlu0 %247
    %249 = vadd.xlane.f32.xlu0 %v246
    %v250 = vpop.xlane.xlu0 %249
    %v251 = vrcp.pop 128.0
    %v252 = vmul.f32 128.0, %v251
    %v253 = vsub.f32 1.0, %v252
    %v254 = vmul.f32 %v251, %v253
    %v255 = vadd.f32 %v251, %v254
    %vm256 = vweird.f32 %v251
    %v257 = vsel %vm256, %v251, %v255
    %v258 = vmul.f32 %v248, %v257
    %v259 = vmul.f32 %v250, %v257
    %v260 = vadd.f32 %v258, 1e-05
    %v261 = vadd.f32 %v259, 1e-05
    %v262 = vrsqrt.pop %v260
    %v263 = vmul.f32 %v262, %v260
    %v264 = vmul.f32 %v263, %v262
    %v265 = vmul.f32 0.5, %v264
    %v266 = vsub.f32 1.5, %v265
    %v267 = vmul.f32 %v262, %v266
    %vm268 = vweird.f32 %v260
    %vm269 = vweird.f32 %v262
    %vm270 = vmor %vm268, %vm269
    %v271 = vsel %vm270, %v262, %v267
    %v272 = vrsqrt.pop %v261
    %v273 = vmul.f32 %v272, %v261
    %v274 = vmul.f32 %v273, %v272
    %v275 = vmul.f32 0.5, %v274
    %v276 = vsub.f32 1.5, %v275
    %v277 = vmul.f32 %v272, %v276
    %vm278 = vweird.f32 %v261
    %vm279 = vweird.f32 %v272
    %vm280 = vmor %vm278, %vm279
    %v281 = vsel %vm280, %v272, %v277
    %v282 = vmul.f32 %v240, %v271
    %v283 = vmul.f32 %v243, %v281
    %v284 = vld [vmem:[%s4] sm:$0x1]
    %v286 = vperm.slane %v284, 0
    %v288 = vmul.f32 %v282, %v286
    %v289 = vmul.f32 %v283, %v286
    %v290 = vpack.c.bf16 %v289, %v288
    %v291 = vld [vmem:[#allocation5] sm:$0xff]
    %v292 = vld [vmem:[#allocation5 + $0x8] sm:$0xff]
    %v293 = vld [vmem:[#allocation5 + $0x10] sm:$0xff]
    %v294 = vld [vmem:[#allocation5 + $0x18] sm:$0xff]
    %v295 = vld [vmem:[#allocation5 + $0x20] sm:$0xff]
    %v296 = vld [vmem:[#allocation5 + $0x28] sm:$0xff]
    %v297 = vld [vmem:[#allocation5 + $0x30] sm:$0xff]
    %v298 = vld [vmem:[#allocation5 + $0x38] sm:$0xff]
    %v299 = vld [vmem:[#allocation5 + $0x40] sm:$0xff]
    %v300 = vld [vmem:[#allocation5 + $0x48] sm:$0xff]
    %v301 = vld [vmem:[#allocation5 + $0x50] sm:$0xff]
    %v302 = vld [vmem:[#allocation5 + $0x58] sm:$0xff]
    %v303 = vld [vmem:[#allocation5 + $0x60] sm:$0xff]
    %v304 = vld [vmem:[#allocation5 + $0x68] sm:$0xff]
    %v305 = vld [vmem:[#allocation5 + $0x70] sm:$0xff]
    %v306 = vld [vmem:[#allocation5 + $0x78] sm:$0xff]
    %v307 = vld [vmem:[#allocation5 + $0x80] sm:$0xff]
    %v308 = vld [vmem:[#allocation5 + $0x88] sm:$0xff]
    %v309 = vld [vmem:[#allocation5 + $0x90] sm:$0xff]
    %v310 = vld [vmem:[#allocation5 + $0x98] sm:$0xff]
    %v311 = vld [vmem:[#allocation5 + $0xa0] sm:$0xff]
    %v312 = vld [vmem:[#allocation5 + $0xa8] sm:$0xff]
    %v313 = vld [vmem:[#allocation5 + $0xb0] sm:$0xff]
    %v314 = vld [vmem:[#allocation5 + $0xb8] sm:$0xff]
    %v315 = vld [vmem:[#allocation5 + $0xc0] sm:$0xff]
    %v316 = vld [vmem:[#allocation5 + $0xc8] sm:$0xff]
    %v317 = vld [vmem:[#allocation5 + $0xd0] sm:$0xff]
    %v318 = vld [vmem:[#allocation5 + $0xd8] sm:$0xff]
    %v319 = vld [vmem:[#allocation5 + $0xe0] sm:$0xff]
    %v320 = vld [vmem:[#allocation5 + $0xe8] sm:$0xff]
    %v321 = vld [vmem:[#allocation5 + $0xf0] sm:$0xff]
    %v322 = vld [vmem:[#allocation5 + $0xf8] sm:$0xff]
    %v355 = vunpack.c.l.b16 %v291
    %v356 = vunpack.c.h.b16 %v291
    %v357 = vunpack.c.l.b16 %v292
    %v358 = vunpack.c.h.b16 %v292
    %v359 = vunpack.c.l.b16 %v293
    %v360 = vunpack.c.h.b16 %v293
    %v361 = vunpack.c.l.b16 %v294
    %v362 = vunpack.c.h.b16 %v294
    %v363 = vunpack.c.l.b16 %v295
    %v364 = vunpack.c.h.b16 %v295
    %v365 = vunpack.c.l.b16 %v296
    %v366 = vunpack.c.h.b16 %v296
    %v367 = vunpack.c.l.b16 %v297
    %v368 = vunpack.c.h.b16 %v297
    %v369 = vunpack.c.l.b16 %v298
    %v370 = vunpack.c.h.b16 %v298
    %v371 = vunpack.c.l.b16 %v299
    %v372 = vunpack.c.h.b16 %v299
    %v373 = vunpack.c.l.b16 %v300
    %v374 = vunpack.c.h.b16 %v300
    %v375 = vunpack.c.l.b16 %v301
    %v376 = vunpack.c.h.b16 %v301
    %v377 = vunpack.c.l.b16 %v302
    %v378 = vunpack.c.h.b16 %v302
    %v379 = vunpack.c.l.b16 %v303
    %v380 = vunpack.c.h.b16 %v303
    %v381 = vunpack.c.l.b16 %v304
    %v382 = vunpack.c.h.b16 %v304
    %v383 = vunpack.c.l.b16 %v305
    %v384 = vunpack.c.h.b16 %v305
    %v385 = vunpack.c.l.b16 %v306
    %v386 = vunpack.c.h.b16 %v306
    %v387 = vunpack.c.l.b16 %v307
    %v388 = vunpack.c.h.b16 %v307
    %v389 = vunpack.c.l.b16 %v308
    %v390 = vunpack.c.h.b16 %v308
    %v391 = vunpack.c.l.b16 %v309
    %v392 = vunpack.c.h.b16 %v309
    %v393 = vunpack.c.l.b16 %v310
    %v394 = vunpack.c.h.b16 %v310
    %v395 = vunpack.c.l.b16 %v311
    %v396 = vunpack.c.h.b16 %v311
    %v397 = vunpack.c.l.b16 %v312
    %v398 = vunpack.c.h.b16 %v312
    %v399 = vunpack.c.l.b16 %v313
    %v400 = vunpack.c.h.b16 %v313
    %v401 = vunpack.c.l.b16 %v314
    %v402 = vunpack.c.h.b16 %v314
    %v403 = vunpack.c.l.b16 %v315
    %v404 = vunpack.c.h.b16 %v315
    %v405 = vunpack.c.l.b16 %v316
    %v406 = vunpack.c.h.b16 %v316
    %v407 = vunpack.c.l.b16 %v317
    %v408 = vunpack.c.h.b16 %v317
    %v409 = vunpack.c.l.b16 %v318
    %v410 = vunpack.c.h.b16 %v318
    %v411 = vunpack.c.l.b16 %v319
    %v412 = vunpack.c.h.b16 %v319
    %v413 = vunpack.c.l.b16 %v320
    %v414 = vunpack.c.h.b16 %v320
    %v415 = vunpack.c.l.b16 %v321
    %v416 = vunpack.c.h.b16 %v321
    %v417 = vunpack.c.l.b16 %v322
    %v418 = vunpack.c.h.b16 %v322
    %v419 = vpack.c.b16 %v359, %v355
    %v420 = vpack.c.b16 %v360, %v356
    %v421 = vpack.c.b16 %v361, %v357
    %v422 = vpack.c.b16 %v362, %v358
    %v423 = vpack.c.b16 %v367, %v363
    %v424 = vpack.c.b16 %v368, %v364
    %v425 = vpack.c.b16 %v369, %v365
    %v426 = vpack.c.b16 %v370, %v366
    %v427 = vpack.c.b16 %v375, %v371
    %v428 = vpack.c.b16 %v376, %v372
    %v429 = vpack.c.b16 %v377, %v373
    %v430 = vpack.c.b16 %v378, %v374
    %v431 = vpack.c.b16 %v383, %v379
    %v432 = vpack.c.b16 %v384, %v380
    %v433 = vpack.c.b16 %v385, %v381
    %v434 = vpack.c.b16 %v386, %v382
    %v435 = vpack.c.b16 %v391, %v387
    %v436 = vpack.c.b16 %v392, %v388
    %v437 = vpack.c.b16 %v393, %v389
    %v438 = vpack.c.b16 %v394, %v390
    %v439 = vpack.c.b16 %v399, %v395
    %v440 = vpack.c.b16 %v400, %v396
    %v441 = vpack.c.b16 %v401, %v397
    %v442 = vpack.c.b16 %v402, %v398
    %v443 = vpack.c.b16 %v407, %v403
    %v444 = vpack.c.b16 %v408, %v404
    %v445 = vpack.c.b16 %v409, %v405
    %v446 = vpack.c.b16 %v410, %v406
    %v447 = vpack.c.b16 %v415, %v411
    %v448 = vpack.c.b16 %v416, %v412
    %v449 = vpack.c.b16 %v417, %v413
    %v450 = vpack.c.b16 %v418, %v414
    %483 = vmatpush.bf16.msra.mxu0 %v447
    %484 = vmatpush.bf16.msra.mxu0 %v443
    %485 = vmatpush.bf16.msra.mxu0 %v439
    %486 = vmatpush.bf16.msra.mxu0 %v435
    %487 = vmatpush.bf16.msra.mxu0 %v431
    %488 = vmatpush.bf16.msra.mxu0 %v427
    %489 = vmatpush.bf16.msra.mxu0 %v423
    %490 = vmatpush.bf16.msra.mxu0 %v419
    %491 = vmatmul.bf16.gmra.mxu0 %v290
    %v492 = vpop.f32.mrf.mxu0
    %v493 = vadd.f32 0.0, %v492
    %v494 = vpop.f32.mrf.mxu0
    %v495 = vadd.f32 0.0, %v494
    %496 = vdwg.mxu0
    %497 = vmatpush.bf16.msra.mxu0 %v448
    %498 = vmatpush.bf16.msra.mxu0 %v444
    %499 = vmatpush.bf16.msra.mxu0 %v440
    %500 = vmatpush.bf16.msra.mxu0 %v436
    %501 = vmatpush.bf16.msra.mxu0 %v432
    %502 = vmatpush.bf16.msra.mxu0 %v428
    %503 = vmatpush.bf16.msra.mxu0 %v424
    %504 = vmatpush.bf16.msra.mxu0 %v420
    %505 = vmatmul.bf16.gmra.mxu0 %v290
    %v506 = vpop.f32.mrf.mxu0
    %v507 = vadd.f32 0.0, %v506
    %v508 = vpop.f32.mrf.mxu0
    %v509 = vadd.f32 0.0, %v508
    %510 = vdwg.mxu0
    %511 = vmatpush.bf16.msra.mxu0 %v449
    %512 = vmatpush.bf16.msra.mxu0 %v445
    %513 = vmatpush.bf16.msra.mxu0 %v441
    %514 = vmatpush.bf16.msra.mxu0 %v437
    %515 = vmatpush.bf16.msra.mxu0 %v433
    %516 = vmatpush.bf16.msra.mxu0 %v429
    %517 = vmatpush.bf16.msra.mxu0 %v425
    %518 = vmatpush.bf16.msra.mxu0 %v421
    %519 = vmatmul.bf16.gmra.mxu0 %v290
    %v520 = vpop.f32.mrf.mxu0
    %v521 = vadd.f32 0.0, %v520
    %v522 = vpop.f32.mrf.mxu0
    %v523 = vadd.f32 0.0, %v522
    %524 = vdwg.mxu0
    %525 = vmatpush.bf16.msra.mxu0 %v450
    %526 = vmatpush.bf16.msra.mxu0 %v446
    %527 = vmatpush.bf16.msra.mxu0 %v442
    %528 = vmatpush.bf16.msra.mxu0 %v438
    %529 = vmatpush.bf16.msra.mxu0 %v434
    %530 = vmatpush.bf16.msra.mxu0 %v430
    %531 = vmatpush.bf16.msra.mxu0 %v426
    %532 = vmatpush.bf16.msra.mxu0 %v422
    %533 = vmatmul.bf16.gmra.mxu0 %v290
    %v534 = vpop.f32.mrf.mxu0
    %v535 = vadd.f32 0.0, %v534
    %v536 = vpop.f32.mrf.mxu0
    %v537 = vadd.f32 0.0, %v536
    %538 = vdwg.mxu0
    %v539 = vxor.u32 %v493, 2147483648
    %v540 = vxor.u32 %v507, 2147483648
    %v541 = vxor.u32 %v495, 2147483648
    %v542 = vxor.u32 %v509, 2147483648
    %v543 = vmul.f32 %v539, 1.442695
    %v544 = vpow.pop %v543
    %v545 = vmul.f32 %v540, 1.442695
    %v546 = vpow.pop %v545
    %v547 = vmul.f32 %v541, 1.442695
    %v548 = vpow.pop %v547
    %v549 = vmul.f32 %v542, 1.442695
    %v550 = vpow.pop %v549
    %v551 = vadd.f32 %v544, 1.0
    %v552 = vadd.f32 %v546, 1.0
    %v553 = vadd.f32 %v548, 1.0
    %v554 = vadd.f32 %v550, 1.0
    %v555 = vrcp.pop %v551
    %v556 = vmul.f32 %v551, %v555
    %v557 = vsub.f32 1.0, %v556
    %v558 = vmul.f32 %v555, %v557
    %v559 = vadd.f32 %v555, %v558
    %vm560 = vweird.f32 %v551
    %vm561 = vweird.f32 %v555
    %vm562 = vmor %vm560, %vm561
    %v563 = vsel %vm562, %v555, %v559
    %v564 = vand.u32 2147483647, %v551
    %vm565 = vcmp.eq.f32.partialorder %v564, 8.507059e+37
    %v566 = vand.u32 %v551, 2147483648
    %v567 = vor.u32 1.1754944e-38, %v566
    %v568 = vsel %vm565, %v567, %v563
    %v569 = vmul.f32 1.0, %v568
    %v570 = vrcp.pop %v552
    %v571 = vmul.f32 %v552, %v570
    %v572 = vsub.f32 1.0, %v571
    %v573 = vmul.f32 %v570, %v572
    %v574 = vadd.f32 %v570, %v573
    %vm575 = vweird.f32 %v552
    %vm576 = vweird.f32 %v570
    %vm577 = vmor %vm575, %vm576
    %v578 = vsel %vm577, %v570, %v574
    %v579 = vand.u32 2147483647, %v552
    %vm580 = vcmp.eq.f32.partialorder %v579, 8.507059e+37
    %v581 = vand.u32 %v552, 2147483648
    %v582 = vor.u32 1.1754944e-38, %v581
    %v583 = vsel %vm580, %v582, %v578
    %v584 = vmul.f32 1.0, %v583
    %v585 = vrcp.pop %v553
    %v586 = vmul.f32 %v553, %v585
    %v587 = vsub.f32 1.0, %v586
    %v588 = vmul.f32 %v585, %v587
    %v589 = vadd.f32 %v585, %v588
    %vm590 = vweird.f32 %v553
    %vm591 = vweird.f32 %v585
    %vm592 = vmor %vm590, %vm591
    %v593 = vsel %vm592, %v585, %v589
    %v594 = vand.u32 2147483647, %v553
    %vm595 = vcmp.eq.f32.partialorder %v594, 8.507059e+37
    %v596 = vand.u32 %v553, 2147483648
    %v597 = vor.u32 1.1754944e-38, %v596
    %v598 = vsel %vm595, %v597, %v593
    %v599 = vmul.f32 1.0, %v598
    %v600 = vrcp.pop %v554
    %v601 = vmul.f32 %v554, %v600
    %v602 = vsub.f32 1.0, %v601
    %v603 = vmul.f32 %v600, %v602
    %v604 = vadd.f32 %v600, %v603
    %vm605 = vweird.f32 %v554
    %vm606 = vweird.f32 %v600
    %vm607 = vmor %vm605, %vm606
    %v608 = vsel %vm607, %v600, %v604
    %v609 = vand.u32 2147483647, %v554
    %vm610 = vcmp.eq.f32.partialorder %v609, 8.507059e+37
    %v611 = vand.u32 %v554, 2147483648
    %v612 = vor.u32 1.1754944e-38, %v611
    %v613 = vsel %vm610, %v612, %v608
    %v614 = vmul.f32 1.0, %v613
    %v615 = vmul.f32 %v493, %v569
    %v616 = vmul.f32 %v507, %v584
    %v617 = vmul.f32 %v495, %v599
    %v618 = vmul.f32 %v509, %v614
    %v619 = vmul.f32 %v615, %v521
    %v620 = vmul.f32 %v616, %v535
    %v621 = vmul.f32 %v617, %v523
    %v622 = vmul.f32 %v618, %v537
    %v623 = vpack.c.bf16 %v621, %v619
    %v624 = vpack.c.bf16 %v622, %v620
    %v625 = vld [vmem:[#allocation7] sm:$0xf]
    %v626 = vld [vmem:[#allocation7 + $0x4] sm:$0xf]
    %v627 = vld [vmem:[#allocation7 + $0x8] sm:$0xf]
    %v628 = vld [vmem:[#allocation7 + $0xc] sm:$0xf]
    %v629 = vld [vmem:[#allocation7 + $0x10] sm:$0xf]
    %v630 = vld [vmem:[#allocation7 + $0x14] sm:$0xf]
    %v631 = vld [vmem:[#allocation7 + $0x18] sm:$0xf]
    %v632 = vld [vmem:[#allocation7 + $0x1c] sm:$0xf]
    %v633 = vld [vmem:[#allocation7 + $0x20] sm:$0xf]
    %v634 = vld [vmem:[#allocation7 + $0x24] sm:$0xf]
    %v635 = vld [vmem:[#allocation7 + $0x28] sm:$0xf]
    %v636 = vld [vmem:[#allocation7 + $0x2c] sm:$0xf]
    %v637 = vld [vmem:[#allocation7 + $0x30] sm:$0xf]
    %v638 = vld [vmem:[#allocation7 + $0x34] sm:$0xf]
    %v639 = vld [vmem:[#allocation7 + $0x38] sm:$0xf]
    %v640 = vld [vmem:[#allocation7 + $0x3c] sm:$0xf]
    %v641 = vld [vmem:[#allocation7 + $0x40] sm:$0xf]
    %v642 = vld [vmem:[#allocation7 + $0x44] sm:$0xf]
    %v643 = vld [vmem:[#allocation7 + $0x48] sm:$0xf]
    %v644 = vld [vmem:[#allocation7 + $0x4c] sm:$0xf]
    %v645 = vld [vmem:[#allocation7 + $0x50] sm:$0xf]
    %v646 = vld [vmem:[#allocation7 + $0x54] sm:$0xf]
    %v647 = vld [vmem:[#allocation7 + $0x58] sm:$0xf]
    %v648 = vld [vmem:[#allocation7 + $0x5c] sm:$0xf]
    %v649 = vld [vmem:[#allocation7 + $0x60] sm:$0xf]
    %v650 = vld [vmem:[#allocation7 + $0x64] sm:$0xf]
    %v651 = vld [vmem:[#allocation7 + $0x68] sm:$0xf]
    %v652 = vld [vmem:[#allocation7 + $0x6c] sm:$0xf]
    %v653 = vld [vmem:[#allocation7 + $0x70] sm:$0xf]
    %v654 = vld [vmem:[#allocation7 + $0x74] sm:$0xf]
    %v655 = vld [vmem:[#allocation7 + $0x78] sm:$0xf]
    %v656 = vld [vmem:[#allocation7 + $0x7c] sm:$0xf]
    %v689 = vunpack.c.l.b16 %v625
    %v690 = vunpack.c.l.b16 %v626
    %v691 = vunpack.c.l.b16 %v627
    %v692 = vunpack.c.l.b16 %v628
    %v693 = vunpack.c.l.b16 %v629
    %v694 = vunpack.c.l.b16 %v630
    %v695 = vunpack.c.l.b16 %v631
    %v696 = vunpack.c.l.b16 %v632
    %v697 = vunpack.c.l.b16 %v633
    %v698 = vunpack.c.l.b16 %v634
    %v699 = vunpack.c.l.b16 %v635
    %v700 = vunpack.c.l.b16 %v636
    %v701 = vunpack.c.l.b16 %v637
    %v702 = vunpack.c.l.b16 %v638
    %v703 = vunpack.c.l.b16 %v639
    %v704 = vunpack.c.l.b16 %v640
    %v705 = vunpack.c.l.b16 %v641
    %v706 = vunpack.c.l.b16 %v642
    %v707 = vunpack.c.l.b16 %v643
    %v708 = vunpack.c.l.b16 %v644
    %v709 = vunpack.c.l.b16 %v645
    %v710 = vunpack.c.l.b16 %v646
    %v711 = vunpack.c.l.b16 %v647
    %v712 = vunpack.c.l.b16 %v648
    %v713 = vunpack.c.l.b16 %v649
    %v714 = vunpack.c.l.b16 %v650
    %v715 = vunpack.c.l.b16 %v651
    %v716 = vunpack.c.l.b16 %v652
    %v717 = vunpack.c.l.b16 %v653
    %v718 = vunpack.c.l.b16 %v654
    %v719 = vunpack.c.l.b16 %v655
    %v720 = vunpack.c.l.b16 %v656
    %v721 = vpack.c.b16 %v690, %v689
    %v722 = vpack.c.b16 %v692, %v691
    %v723 = vpack.c.b16 %v694, %v693
    %v724 = vpack.c.b16 %v696, %v695
    %v725 = vpack.c.b16 %v698, %v697
    %v726 = vpack.c.b16 %v700, %v699
    %v727 = vpack.c.b16 %v702, %v701
    %v728 = vpack.c.b16 %v704, %v703
    %v729 = vpack.c.b16 %v706, %v705
    %v730 = vpack.c.b16 %v708, %v707
    %v731 = vpack.c.b16 %v710, %v709
    %v732 = vpack.c.b16 %v712, %v711
    %v733 = vpack.c.b16 %v714, %v713
    %v734 = vpack.c.b16 %v716, %v715
    %v735 = vpack.c.b16 %v718, %v717
    %v736 = vpack.c.b16 %v720, %v719
    %753 = vmatpush.bf16.msra.mxu0 %v728
    %754 = vmatpush.bf16.msra.mxu0 %v727
    %755 = vmatpush.bf16.msra.mxu0 %v726
    %756 = vmatpush.bf16.msra.mxu0 %v725
    %757 = vmatpush.bf16.msra.mxu0 %v724
    %758 = vmatpush.bf16.msra.mxu0 %v723
    %759 = vmatpush.bf16.msra.mxu0 %v722
    %760 = vmatpush.bf16.msra.mxu0 %v721
    %761 = vmatmul.bf16.gmra.mxu0 %v623
    %v762 = vpop.f32.mrf.mxu0
    %v763 = vadd.f32 0.0, %v762
    %v764 = vpop.f32.mrf.mxu0
    %v765 = vadd.f32 0.0, %v764
    %766 = vdwg.mxu0
    %767 = vmatpush.bf16.msra.mxu0 %v736
    %768 = vmatpush.bf16.msra.mxu0 %v735
    %769 = vmatpush.bf16.msra.mxu0 %v734
    %770 = vmatpush.bf16.msra.mxu0 %v733
    %771 = vmatpush.bf16.msra.mxu0 %v732
    %772 = vmatpush.bf16.msra.mxu0 %v731
    %773 = vmatpush.bf16.msra.mxu0 %v730
    %774 = vmatpush.bf16.msra.mxu0 %v729
    %775 = vmatmul.bf16.gmra.mxu0 %v624
    %v776 = vpop.f32.mrf.mxu0
    %v777 = vadd.f32 %v763, %v776
    %v778 = vpop.f32.mrf.mxu0
    %v779 = vadd.f32 %v765, %v778
    %780 = vdwg.mxu0
    %v781 = vadd.f32 %v240, %v777
    %v782 = vadd.f32 %v243, %v779
    %v783 = vmul.f32 %v781, %v781
    %v784 = vmul.f32 %v782, %v782
    %785 = vadd.xlane.f32.xlu0 %v783
    %v786 = vpop.xlane.xlu0 %785
    %787 = vadd.xlane.f32.xlu0 %v784
    %v788 = vpop.xlane.xlu0 %787
    %v789 = vmul.f32 %v786, %v257
    %v790 = vmul.f32 %v788, %v257
    %v791 = vadd.f32 %v789, 1e-05
    %v792 = vadd.f32 %v790, 1e-05
    %v793 = vrsqrt.pop %v791
    %v794 = vmul.f32 %v793, %v791
    %v795 = vmul.f32 %v794, %v793
    %v796 = vmul.f32 0.5, %v795
    %v797 = vsub.f32 1.5, %v796
    %v798 = vmul.f32 %v793, %v797
    %vm799 = vweird.f32 %v791
    %vm800 = vweird.f32 %v793
    %vm801 = vmor %vm799, %vm800
    %v802 = vsel %vm801, %v793, %v798
    %v803 = vrsqrt.pop %v792
    %v804 = vmul.f32 %v803, %v792
    %v805 = vmul.f32 %v804, %v803
    %v806 = vmul.f32 0.5, %v805
    %v807 = vsub.f32 1.5, %v806
    %v808 = vmul.f32 %v803, %v807
    %vm809 = vweird.f32 %v792
    %vm810 = vweird.f32 %v803
    %vm811 = vmor %vm809, %vm810
    %v812 = vsel %vm811, %v803, %v808
    %v813 = vmul.f32 %v781, %v802
    %v814 = vmul.f32 %v782, %v812
    %s815 = scalar_lea.vmem %s4, 1
    %v816 = vld [vmem:[%s815] sm:$0x1]
    %v818 = vperm.slane %v816, 0
    %v820 = vmul.f32 %v813, %v818
    %v821 = vmul.f32 %v814, %v818
    %v822 = vpack.c.bf16 %v821, %v820
    %s823 = scalar_lea.vmem [#allocation5], 256
    %v824 = vld [vmem:[%s823] sm:$0xff]
    %v825 = vld [vmem:[%s823 + $0x8] sm:$0xff]
    %v826 = vld [vmem:[%s823 + $0x10] sm:$0xff]
    %v827 = vld [vmem:[%s823 + $0x18] sm:$0xff]
    %v828 = vld [vmem:[%s823 + $0x20] sm:$0xff]
    %v829 = vld [vmem:[%s823 + $0x28] sm:$0xff]
    %v830 = vld [vmem:[%s823 + $0x30] sm:$0xff]
    %v831 = vld [vmem:[%s823 + $0x38] sm:$0xff]
    %v832 = vld [vmem:[%s823 + $0x40] sm:$0xff]
    %v833 = vld [vmem:[%s823 + $0x48] sm:$0xff]
    %v834 = vld [vmem:[%s823 + $0x50] sm:$0xff]
    %v835 = vld [vmem:[%s823 + $0x58] sm:$0xff]
    %v836 = vld [vmem:[%s823 + $0x60] sm:$0xff]
    %v837 = vld [vmem:[%s823 + $0x68] sm:$0xff]
    %v838 = vld [vmem:[%s823 + $0x70] sm:$0xff]
    %v839 = vld [vmem:[%s823 + $0x78] sm:$0xff]
    %v840 = vld [vmem:[%s823 + $0x80] sm:$0xff]
    %v841 = vld [vmem:[%s823 + $0x88] sm:$0xff]
    %v842 = vld [vmem:[%s823 + $0x90] sm:$0xff]
    %v843 = vld [vmem:[%s823 + $0x98] sm:$0xff]
    %v844 = vld [vmem:[%s823 + $0xa0] sm:$0xff]
    %v845 = vld [vmem:[%s823 + $0xa8] sm:$0xff]
    %v846 = vld [vmem:[%s823 + $0xb0] sm:$0xff]
    %v847 = vld [vmem:[%s823 + $0xb8] sm:$0xff]
    %v848 = vld [vmem:[%s823 + $0xc0] sm:$0xff]
    %v849 = vld [vmem:[%s823 + $0xc8] sm:$0xff]
    %v850 = vld [vmem:[%s823 + $0xd0] sm:$0xff]
    %v851 = vld [vmem:[%s823 + $0xd8] sm:$0xff]
    %v852 = vld [vmem:[%s823 + $0xe0] sm:$0xff]
    %v853 = vld [vmem:[%s823 + $0xe8] sm:$0xff]
    %v854 = vld [vmem:[%s823 + $0xf0] sm:$0xff]
    %v855 = vld [vmem:[%s823 + $0xf8] sm:$0xff]
    %v888 = vunpack.c.l.b16 %v824
    %v889 = vunpack.c.h.b16 %v824
    %v890 = vunpack.c.l.b16 %v825
    %v891 = vunpack.c.h.b16 %v825
    %v892 = vunpack.c.l.b16 %v826
    %v893 = vunpack.c.h.b16 %v826
    %v894 = vunpack.c.l.b16 %v827
    %v895 = vunpack.c.h.b16 %v827
    %v896 = vunpack.c.l.b16 %v828
    %v897 = vunpack.c.h.b16 %v828
    %v898 = vunpack.c.l.b16 %v829
    %v899 = vunpack.c.h.b16 %v829
    %v900 = vunpack.c.l.b16 %v830
    %v901 = vunpack.c.h.b16 %v830
    %v902 = vunpack.c.l.b16 %v831
    %v903 = vunpack.c.h.b16 %v831
    %v904 = vunpack.c.l.b16 %v832
    %v905 = vunpack.c.h.b16 %v832
    %v906 = vunpack.c.l.b16 %v833
    %v907 = vunpack.c.h.b16 %v833
    %v908 = vunpack.c.l.b16 %v834
    %v909 = vunpack.c.h.b16 %v834
    %v910 = vunpack.c.l.b16 %v835
    %v911 = vunpack.c.h.b16 %v835
    %v912 = vunpack.c.l.b16 %v836
    %v913 = vunpack.c.h.b16 %v836
    %v914 = vunpack.c.l.b16 %v837
    %v915 = vunpack.c.h.b16 %v837
    %v916 = vunpack.c.l.b16 %v838
    %v917 = vunpack.c.h.b16 %v838
    %v918 = vunpack.c.l.b16 %v839
    %v919 = vunpack.c.h.b16 %v839
    %v920 = vunpack.c.l.b16 %v840
    %v921 = vunpack.c.h.b16 %v840
    %v922 = vunpack.c.l.b16 %v841
    %v923 = vunpack.c.h.b16 %v841
    %v924 = vunpack.c.l.b16 %v842
    %v925 = vunpack.c.h.b16 %v842
    %v926 = vunpack.c.l.b16 %v843
    %v927 = vunpack.c.h.b16 %v843
    %v928 = vunpack.c.l.b16 %v844
    %v929 = vunpack.c.h.b16 %v844
    %v930 = vunpack.c.l.b16 %v845
    %v931 = vunpack.c.h.b16 %v845
    %v932 = vunpack.c.l.b16 %v846
    %v933 = vunpack.c.h.b16 %v846
    %v934 = vunpack.c.l.b16 %v847
    %v935 = vunpack.c.h.b16 %v847
    %v936 = vunpack.c.l.b16 %v848
    %v937 = vunpack.c.h.b16 %v848
    %v938 = vunpack.c.l.b16 %v849
    %v939 = vunpack.c.h.b16 %v849
    %v940 = vunpack.c.l.b16 %v850
    %v941 = vunpack.c.h.b16 %v850
    %v942 = vunpack.c.l.b16 %v851
    %v943 = vunpack.c.h.b16 %v851
    %v944 = vunpack.c.l.b16 %v852
    %v945 = vunpack.c.h.b16 %v852
    %v946 = vunpack.c.l.b16 %v853
    %v947 = vunpack.c.h.b16 %v853
    %v948 = vunpack.c.l.b16 %v854
    %v949 = vunpack.c.h.b16 %v854
    %v950 = vunpack.c.l.b16 %v855
    %v951 = vunpack.c.h.b16 %v855
    %v952 = vpack.c.b16 %v892, %v888
    %v953 = vpack.c.b16 %v893, %v889
    %v954 = vpack.c.b16 %v894, %v890
    %v955 = vpack.c.b16 %v895, %v891
    %v956 = vpack.c.b16 %v900, %v896
    %v957 = vpack.c.b16 %v901, %v897
    %v958 = vpack.c.b16 %v902, %v898
    %v959 = vpack.c.b16 %v903, %v899
    %v960 = vpack.c.b16 %v908, %v904
    %v961 = vpack.c.b16 %v909, %v905
    %v962 = vpack.c.b16 %v910, %v906
    %v963 = vpack.c.b16 %v911, %v907
    %v964 = vpack.c.b16 %v916, %v912
    %v965 = vpack.c.b16 %v917, %v913
    %v966 = vpack.c.b16 %v918, %v914
    %v967 = vpack.c.b16 %v919, %v915
    %v968 = vpack.c.b16 %v924, %v920
    %v969 = vpack.c.b16 %v925, %v921
    %v970 = vpack.c.b16 %v926, %v922
    %v971 = vpack.c.b16 %v927, %v923
    %v972 = vpack.c.b16 %v932, %v928
    %v973 = vpack.c.b16 %v933, %v929
    %v974 = vpack.c.b16 %v934, %v930
    %v975 = vpack.c.b16 %v935, %v931
    %v976 = vpack.c.b16 %v940, %v936
    %v977 = vpack.c.b16 %v941, %v937
    %v978 = vpack.c.b16 %v942, %v938
    %v979 = vpack.c.b16 %v943, %v939
    %v980 = vpack.c.b16 %v948, %v944
    %v981 = vpack.c.b16 %v949, %v945
    %v982 = vpack.c.b16 %v950, %v946
    %v983 = vpack.c.b16 %v951, %v947
    %1016 = vmatpush.bf16.msra.mxu0 %v980
    %1017 = vmatpush.bf16.msra.mxu0 %v976
    %1018 = vmatpush.bf16.msra.mxu0 %v972
    %1019 = vmatpush.bf16.msra.mxu0 %v968
    %1020 = vmatpush.bf16.msra.mxu0 %v964
    %1021 = vmatpush.bf16.msra.mxu0 %v960
    %1022 = vmatpush.bf16.msra.mxu0 %v956
    %1023 = vmatpush.bf16.msra.mxu0 %v952
    %1024 = vmatmul.bf16.gmra.mxu0 %v822
    %v1025 = vpop.f32.mrf.mxu0
    %v1026 = vadd.f32 0.0, %v1025
    %v1027 = vpop.f32.mrf.mxu0
    %v1028 = vadd.f32 0.0, %v1027
    %1029 = vdwg.mxu0
    %1030 = vmatpush.bf16.msra.mxu0 %v981
    %1031 = vmatpush.bf16.msra.mxu0 %v977
    %1032 = vmatpush.bf16.msra.mxu0 %v973
    %1033 = vmatpush.bf16.msra.mxu0 %v969
    %1034 = vmatpush.bf16.msra.mxu0 %v965
    %1035 = vmatpush.bf16.msra.mxu0 %v961
    %1036 = vmatpush.bf16.msra.mxu0 %v957
    %1037 = vmatpush.bf16.msra.mxu0 %v953
    %1038 = vmatmul.bf16.gmra.mxu0 %v822
    %v1039 = vpop.f32.mrf.mxu0
    %v1040 = vadd.f32 0.0, %v1039
    %v1041 = vpop.f32.mrf.mxu0
    %v1042 = vadd.f32 0.0, %v1041
    %1043 = vdwg.mxu0
    %1044 = vmatpush.bf16.msra.mxu0 %v982
    %1045 = vmatpush.bf16.msra.mxu0 %v978
    %1046 = vmatpush.bf16.msra.mxu0 %v974
    %1047 = vmatpush.bf16.msra.mxu0 %v970
    %1048 = vmatpush.bf16.msra.mxu0 %v966
    %1049 = vmatpush.bf16.msra.mxu0 %v962
    %1050 = vmatpush.bf16.msra.mxu0 %v958
    %1051 = vmatpush.bf16.msra.mxu0 %v954
    %1052 = vmatmul.bf16.gmra.mxu0 %v822
    %v1053 = vpop.f32.mrf.mxu0
    %v1054 = vadd.f32 0.0, %v1053
    %v1055 = vpop.f32.mrf.mxu0
    %v1056 = vadd.f32 0.0, %v1055
    %1057 = vdwg.mxu0
    %1058 = vmatpush.bf16.msra.mxu0 %v983
    %1059 = vmatpush.bf16.msra.mxu0 %v979
    %1060 = vmatpush.bf16.msra.mxu0 %v975
    %1061 = vmatpush.bf16.msra.mxu0 %v971
    %1062 = vmatpush.bf16.msra.mxu0 %v967
    %1063 = vmatpush.bf16.msra.mxu0 %v963
    %1064 = vmatpush.bf16.msra.mxu0 %v959
    %1065 = vmatpush.bf16.msra.mxu0 %v955
    %1066 = vmatmul.bf16.gmra.mxu0 %v822
    %v1067 = vpop.f32.mrf.mxu0
    %v1068 = vadd.f32 0.0, %v1067
    %v1069 = vpop.f32.mrf.mxu0
    %v1070 = vadd.f32 0.0, %v1069
    %1071 = vdwg.mxu0
    %v1072 = vxor.u32 %v1026, 2147483648
    %v1073 = vxor.u32 %v1040, 2147483648
    %v1074 = vxor.u32 %v1028, 2147483648
    %v1075 = vxor.u32 %v1042, 2147483648
    %v1076 = vmul.f32 %v1072, 1.442695
    %v1077 = vpow.pop %v1076
    %v1078 = vmul.f32 %v1073, 1.442695
    %v1079 = vpow.pop %v1078
    %v1080 = vmul.f32 %v1074, 1.442695
    %v1081 = vpow.pop %v1080
    %v1082 = vmul.f32 %v1075, 1.442695
    %v1083 = vpow.pop %v1082
    %v1084 = vadd.f32 %v1077, 1.0
    %v1085 = vadd.f32 %v1079, 1.0
    %v1086 = vadd.f32 %v1081, 1.0
    %v1087 = vadd.f32 %v1083, 1.0
    %v1088 = vrcp.pop %v1084
    %v1089 = vmul.f32 %v1084, %v1088
    %v1090 = vsub.f32 1.0, %v1089
    %v1091 = vmul.f32 %v1088, %v1090
    %v1092 = vadd.f32 %v1088, %v1091
    %vm1093 = vweird.f32 %v1084
    %vm1094 = vweird.f32 %v1088
    %vm1095 = vmor %vm1093, %vm1094
    %v1096 = vsel %vm1095, %v1088, %v1092
    %v1097 = vand.u32 2147483647, %v1084
    %vm1098 = vcmp.eq.f32.partialorder %v1097, 8.507059e+37
    %v1099 = vand.u32 %v1084, 2147483648
    %v1100 = vor.u32 1.1754944e-38, %v1099
    %v1101 = vsel %vm1098, %v1100, %v1096
    %v1102 = vmul.f32 1.0, %v1101
    %v1103 = vrcp.pop %v1085
    %v1104 = vmul.f32 %v1085, %v1103
    %v1105 = vsub.f32 1.0, %v1104
    %v1106 = vmul.f32 %v1103, %v1105
    %v1107 = vadd.f32 %v1103, %v1106
    %vm1108 = vweird.f32 %v1085
    %vm1109 = vweird.f32 %v1103
    %vm1110 = vmor %vm1108, %vm1109
    %v1111 = vsel %vm1110, %v1103, %v1107
    %v1112 = vand.u32 2147483647, %v1085
    %vm1113 = vcmp.eq.f32.partialorder %v1112, 8.507059e+37
    %v1114 = vand.u32 %v1085, 2147483648
    %v1115 = vor.u32 1.1754944e-38, %v1114
    %v1116 = vsel %vm1113, %v1115, %v1111
    %v1117 = vmul.f32 1.0, %v1116
    %v1118 = vrcp.pop %v1086
    %v1119 = vmul.f32 %v1086, %v1118
    %v1120 = vsub.f32 1.0, %v1119
    %v1121 = vmul.f32 %v1118, %v1120
    %v1122 = vadd.f32 %v1118, %v1121
    %vm1123 = vweird.f32 %v1086
    %vm1124 = vweird.f32 %v1118
    %vm1125 = vmor %vm1123, %vm1124
    %v1126 = vsel %vm1125, %v1118, %v1122
    %v1127 = vand.u32 2147483647, %v1086
    %vm1128 = vcmp.eq.f32.partialorder %v1127, 8.507059e+37
    %v1129 = vand.u32 %v1086, 2147483648
    %v1130 = vor.u32 1.1754944e-38, %v1129
    %v1131 = vsel %vm1128, %v1130, %v1126
    %v1132 = vmul.f32 1.0, %v1131
    %v1133 = vrcp.pop %v1087
    %v1134 = vmul.f32 %v1087, %v1133
    %v1135 = vsub.f32 1.0, %v1134
    %v1136 = vmul.f32 %v1133, %v1135
    %v1137 = vadd.f32 %v1133, %v1136
    %vm1138 = vweird.f32 %v1087
    %vm1139 = vweird.f32 %v1133
    %vm1140 = vmor %vm1138, %vm1139
    %v1141 = vsel %vm1140, %v1133, %v1137
    %v1142 = vand.u32 2147483647, %v1087
    %vm1143 = vcmp.eq.f32.partialorder %v1142, 8.507059e+37
    %v1144 = vand.u32 %v1087, 2147483648
    %v1145 = vor.u32 1.1754944e-38, %v1144
    %v1146 = vsel %vm1143, %v1145, %v1141
    %v1147 = vmul.f32 1.0, %v1146
    %v1148 = vmul.f32 %v1026, %v1102
    %v1149 = vmul.f32 %v1040, %v1117
    %v1150 = vmul.f32 %v1028, %v1132
    %v1151 = vmul.f32 %v1042, %v1147
    %v1152 = vmul.f32 %v1148, %v1054
    %v1153 = vmul.f32 %v1149, %v1068
    %v1154 = vmul.f32 %v1150, %v1056
    %v1155 = vmul.f32 %v1151, %v1070
    %v1156 = vpack.c.bf16 %v1154, %v1152
    %v1157 = vpack.c.bf16 %v1155, %v1153
    %s1158 = scalar_lea.vmem [#allocation7], 128
    %v1159 = vld [vmem:[%s1158] sm:$0xf]
    %v1160 = vld [vmem:[%s1158 + $0x4] sm:$0xf]
    %v1161 = vld [vmem:[%s1158 + $0x8] sm:$0xf]
    %v1162 = vld [vmem:[%s1158 + $0xc] sm:$0xf]
    %v1163 = vld [vmem:[%s1158 + $0x10] sm:$0xf]
    %v1164 = vld [vmem:[%s1158 + $0x14] sm:$0xf]
    %v1165 = vld [vmem:[%s1158 + $0x18] sm:$0xf]
    %v1166 = vld [vmem:[%s1158 + $0x1c] sm:$0xf]
    %v1167 = vld [vmem:[%s1158 + $0x20] sm:$0xf]
    %v1168 = vld [vmem:[%s1158 + $0x24] sm:$0xf]
    %v1169 = vld [vmem:[%s1158 + $0x28] sm:$0xf]
    %v1170 = vld [vmem:[%s1158 + $0x2c] sm:$0xf]
    %v1171 = vld [vmem:[%s1158 + $0x30] sm:$0xf]
    %v1172 = vld [vmem:[%s1158 + $0x34] sm:$0xf]
    %v1173 = vld [vmem:[%s1158 + $0x38] sm:$0xf]
    %v1174 = vld [vmem:[%s1158 + $0x3c] sm:$0xf]
    %v1175 = vld [vmem:[%s1158 + $0x40] sm:$0xf]
    %v1176 = vld [vmem:[%s1158 + $0x44] sm:$0xf]
    %v1177 = vld [vmem:[%s1158 + $0x48] sm:$0xf]
    %v1178 = vld [vmem:[%s1158 + $0x4c] sm:$0xf]
    %v1179 = vld [vmem:[%s1158 + $0x50] sm:$0xf]
    %v1180 = vld [vmem:[%s1158 + $0x54] sm:$0xf]
    %v1181 = vld [vmem:[%s1158 + $0x58] sm:$0xf]
    %v1182 = vld [vmem:[%s1158 + $0x5c] sm:$0xf]
    %v1183 = vld [vmem:[%s1158 + $0x60] sm:$0xf]
    %v1184 = vld [vmem:[%s1158 + $0x64] sm:$0xf]
    %v1185 = vld [vmem:[%s1158 + $0x68] sm:$0xf]
    %v1186 = vld [vmem:[%s1158 + $0x6c] sm:$0xf]
    %v1187 = vld [vmem:[%s1158 + $0x70] sm:$0xf]
    %v1188 = vld [vmem:[%s1158 + $0x74] sm:$0xf]
    %v1189 = vld [vmem:[%s1158 + $0x78] sm:$0xf]
    %v1190 = vld [vmem:[%s1158 + $0x7c] sm:$0xf]
    %v1223 = vunpack.c.l.b16 %v1159
    %v1224 = vunpack.c.l.b16 %v1160
    %v1225 = vunpack.c.l.b16 %v1161
    %v1226 = vunpack.c.l.b16 %v1162
    %v1227 = vunpack.c.l.b16 %v1163
    %v1228 = vunpack.c.l.b16 %v1164
    %v1229 = vunpack.c.l.b16 %v1165
    %v1230 = vunpack.c.l.b16 %v1166
    %v1231 = vunpack.c.l.b16 %v1167
    %v1232 = vunpack.c.l.b16 %v1168
    %v1233 = vunpack.c.l.b16 %v1169
    %v1234 = vunpack.c.l.b16 %v1170
    %v1235 = vunpack.c.l.b16 %v1171
    %v1236 = vunpack.c.l.b16 %v1172
    %v1237 = vunpack.c.l.b16 %v1173
    %v1238 = vunpack.c.l.b16 %v1174
    %v1239 = vunpack.c.l.b16 %v1175
    %v1240 = vunpack.c.l.b16 %v1176
    %v1241 = vunpack.c.l.b16 %v1177
    %v1242 = vunpack.c.l.b16 %v1178
    %v1243 = vunpack.c.l.b16 %v1179
    %v1244 = vunpack.c.l.b16 %v1180
    %v1245 = vunpack.c.l.b16 %v1181
    %v1246 = vunpack.c.l.b16 %v1182
    %v1247 = vunpack.c.l.b16 %v1183
    %v1248 = vunpack.c.l.b16 %v1184
    %v1249 = vunpack.c.l.b16 %v1185
    %v1250 = vunpack.c.l.b16 %v1186
    %v1251 = vunpack.c.l.b16 %v1187
    %v1252 = vunpack.c.l.b16 %v1188
    %v1253 = vunpack.c.l.b16 %v1189
    %v1254 = vunpack.c.l.b16 %v1190
    %v1255 = vpack.c.b16 %v1224, %v1223
    %v1256 = vpack.c.b16 %v1226, %v1225
    %v1257 = vpack.c.b16 %v1228, %v1227
    %v1258 = vpack.c.b16 %v1230, %v1229
    %v1259 = vpack.c.b16 %v1232, %v1231
    %v1260 = vpack.c.b16 %v1234, %v1233
    %v1261 = vpack.c.b16 %v1236, %v1235
    %v1262 = vpack.c.b16 %v1238, %v1237
    %v1263 = vpack.c.b16 %v1240, %v1239
    %v1264 = vpack.c.b16 %v1242, %v1241
    %v1265 = vpack.c.b16 %v1244, %v1243
    %v1266 = vpack.c.b16 %v1246, %v1245
    %v1267 = vpack.c.b16 %v1248, %v1247
    %v1268 = vpack.c.b16 %v1250, %v1249
    %v1269 = vpack.c.b16 %v1252, %v1251
    %v1270 = vpack.c.b16 %v1254, %v1253
    %1287 = vmatpush.bf16.msra.mxu0 %v1262
    %1288 = vmatpush.bf16.msra.mxu0 %v1261
    %1289 = vmatpush.bf16.msra.mxu0 %v1260
    %1290 = vmatpush.bf16.msra.mxu0 %v1259
    %1291 = vmatpush.bf16.msra.mxu0 %v1258
    %1292 = vmatpush.bf16.msra.mxu0 %v1257
    %1293 = vmatpush.bf16.msra.mxu0 %v1256
    %1294 = vmatpush.bf16.msra.mxu0 %v1255
    %1295 = vmatmul.bf16.gmra.mxu0 %v1156
    %v1296 = vpop.f32.mrf.mxu0
    %v1297 = vadd.f32 0.0, %v1296
    %v1298 = vpop.f32.mrf.mxu0
    %v1299 = vadd.f32 0.0, %v1298
    %1300 = vdwg.mxu0
    %1301 = vmatpush.bf16.msra.mxu0 %v1270
    %1302 = vmatpush.bf16.msra.mxu0 %v1269
    %1303 = vmatpush.bf16.msra.mxu0 %v1268
    %1304 = vmatpush.bf16.msra.mxu0 %v1267
    %1305 = vmatpush.bf16.msra.mxu0 %v1266
    %1306 = vmatpush.bf16.msra.mxu0 %v1265
    %1307 = vmatpush.bf16.msra.mxu0 %v1264
    %1308 = vmatpush.bf16.msra.mxu0 %v1263
    %1309 = vmatmul.bf16.gmra.mxu0 %v1157
    %v1310 = vpop.f32.mrf.mxu0
    %v1311 = vadd.f32 %v1297, %v1310
    %v1312 = vpop.f32.mrf.mxu0
    %v1313 = vadd.f32 %v1299, %v1312
    %1314 = vdwg.mxu0
    %v1315 = vadd.f32 %v781, %v1311
    %v1316 = vadd.f32 %v782, %v1313
    %v1317 = vmul.f32 %v1315, %v1315
    %v1318 = vmul.f32 %v1316, %v1316
    %1319 = vadd.xlane.f32.xlu0 %v1317
    %v1320 = vpop.xlane.xlu0 %1319
    %1321 = vadd.xlane.f32.xlu0 %v1318
    %v1322 = vpop.xlane.xlu0 %1321
    %v1323 = vmul.f32 %v1320, %v257
    %v1324 = vmul.f32 %v1322, %v257
    %v1325 = vadd.f32 %v1323, 1e-05
    %v1326 = vadd.f32 %v1324, 1e-05
    %v1327 = vrsqrt.pop %v1325
    %v1328 = vmul.f32 %v1327, %v1325
    %v1329 = vmul.f32 %v1328, %v1327
    %v1330 = vmul.f32 0.5, %v1329
    %v1331 = vsub.f32 1.5, %v1330
    %v1332 = vmul.f32 %v1327, %v1331
    %vm1333 = vweird.f32 %v1325
    %vm1334 = vweird.f32 %v1327
    %vm1335 = vmor %vm1333, %vm1334
    %v1336 = vsel %vm1335, %v1327, %v1332
    %v1337 = vrsqrt.pop %v1326
    %v1338 = vmul.f32 %v1337, %v1326
    %v1339 = vmul.f32 %v1338, %v1337
    %v1340 = vmul.f32 0.5, %v1339
    %v1341 = vsub.f32 1.5, %v1340
    %v1342 = vmul.f32 %v1337, %v1341
    %vm1343 = vweird.f32 %v1326
    %vm1344 = vweird.f32 %v1337
    %vm1345 = vmor %vm1343, %vm1344
    %v1346 = vsel %vm1345, %v1337, %v1342
    %v1347 = vmul.f32 %v1315, %v1336
    %v1348 = vmul.f32 %v1316, %v1346
    %v1349 = vpack.c.bf16 %v1348, %v1347
    %v1350 = vld [vmem:[#allocation8] sm:$0xff]
    %v1351 = vld [vmem:[#allocation8 + $0x8] sm:$0xff]
    %v1352 = vld [vmem:[#allocation8 + $0x10] sm:$0xff]
    %v1353 = vld [vmem:[#allocation8 + $0x18] sm:$0xff]
    %v1354 = vld [vmem:[#allocation8 + $0x20] sm:$0xff]
    %v1355 = vld [vmem:[#allocation8 + $0x28] sm:$0xff]
    %v1356 = vld [vmem:[#allocation8 + $0x30] sm:$0xff]
    %v1357 = vld [vmem:[#allocation8 + $0x38] sm:$0xff]
    %v1358 = vld [vmem:[#allocation8 + $0x40] sm:$0xff]
    %v1359 = vld [vmem:[#allocation8 + $0x48] sm:$0xff]
    %v1360 = vld [vmem:[#allocation8 + $0x50] sm:$0xff]
    %v1361 = vld [vmem:[#allocation8 + $0x58] sm:$0xff]
    %v1362 = vld [vmem:[#allocation8 + $0x60] sm:$0xff]
    %v1363 = vld [vmem:[#allocation8 + $0x68] sm:$0xff]
    %v1364 = vld [vmem:[#allocation8 + $0x70] sm:$0xff]
    %v1365 = vld [vmem:[#allocation8 + $0x78] sm:$0xff]
    %v1366 = vld [vmem:[%s8] sm:$0x3]
    %v1368 = vperm.slane %v1366, 0
    %v1369 = vperm.slane %v1366, 1
    %v1388 = vunpack.c.l.b16 %v1350
    %v1389 = vunpack.c.h.b16 %v1350
    %v1390 = vunpack.c.l.b16 %v1351
    %v1391 = vunpack.c.h.b16 %v1351
    %v1392 = vunpack.c.l.b16 %v1352
    %v1393 = vunpack.c.h.b16 %v1352
    %v1394 = vunpack.c.l.b16 %v1353
    %v1395 = vunpack.c.h.b16 %v1353
    %v1396 = vunpack.c.l.b16 %v1354
    %v1397 = vunpack.c.h.b16 %v1354
    %v1398 = vunpack.c.l.b16 %v1355
    %v1399 = vunpack.c.h.b16 %v1355
    %v1400 = vunpack.c.l.b16 %v1356
    %v1401 = vunpack.c.h.b16 %v1356
    %v1402 = vunpack.c.l.b16 %v1357
    %v1403 = vunpack.c.h.b16 %v1357
    %v1404 = vunpack.c.l.b16 %v1358
    %v1405 = vunpack.c.h.b16 %v1358
    %v1406 = vunpack.c.l.b16 %v1359
    %v1407 = vunpack.c.h.b16 %v1359
    %v1408 = vunpack.c.l.b16 %v1360
    %v1409 = vunpack.c.h.b16 %v1360
    %v1410 = vunpack.c.l.b16 %v1361
    %v1411 = vunpack.c.h.b16 %v1361
    %v1412 = vunpack.c.l.b16 %v1362
    %v1413 = vunpack.c.h.b16 %v1362
    %v1414 = vunpack.c.l.b16 %v1363
    %v1415 = vunpack.c.h.b16 %v1363
    %v1416 = vunpack.c.l.b16 %v1364
    %v1417 = vunpack.c.h.b16 %v1364
    %v1418 = vunpack.c.l.b16 %v1365
    %v1419 = vunpack.c.h.b16 %v1365
    %v1420 = vpack.c.b16 %v1390, %v1388
    %v1421 = vpack.c.b16 %v1391, %v1389
    %v1422 = vpack.c.b16 %v1394, %v1392
    %v1423 = vpack.c.b16 %v1395, %v1393
    %v1424 = vpack.c.b16 %v1398, %v1396
    %v1425 = vpack.c.b16 %v1399, %v1397
    %v1426 = vpack.c.b16 %v1402, %v1400
    %v1427 = vpack.c.b16 %v1403, %v1401
    %v1428 = vpack.c.b16 %v1406, %v1404
    %v1429 = vpack.c.b16 %v1407, %v1405
    %v1430 = vpack.c.b16 %v1410, %v1408
    %v1431 = vpack.c.b16 %v1411, %v1409
    %v1432 = vpack.c.b16 %v1414, %v1412
    %v1433 = vpack.c.b16 %v1415, %v1413
    %v1434 = vpack.c.b16 %v1418, %v1416
    %v1435 = vpack.c.b16 %v1419, %v1417
    %1452 = vmatpush.bf16.msra.mxu0 %v1434
    %1453 = vmatpush.bf16.msra.mxu0 %v1432
    %1454 = vmatpush.bf16.msra.mxu0 %v1430
    %1455 = vmatpush.bf16.msra.mxu0 %v1428
    %1456 = vmatpush.bf16.msra.mxu0 %v1426
    %1457 = vmatpush.bf16.msra.mxu0 %v1424
    %1458 = vmatpush.bf16.msra.mxu0 %v1422
    %1459 = vmatpush.bf16.msra.mxu0 %v1420
    %1460 = vmatmul.bf16.gmra.mxu0 %v1349
    %v1461 = vpop.f32.mrf.mxu0
    %v1462 = vadd.f32 %v1368, %v1461
    %v1463 = vpop.f32.mrf.mxu0
    %v1464 = vadd.f32 %v1368, %v1463
    %1465 = vdwg.mxu0
    %1466 = vmatpush.bf16.msra.mxu0 %v1435
    %1467 = vmatpush.bf16.msra.mxu0 %v1433
    %1468 = vmatpush.bf16.msra.mxu0 %v1431
    %1469 = vmatpush.bf16.msra.mxu0 %v1429
    %1470 = vmatpush.bf16.msra.mxu0 %v1427
    %1471 = vmatpush.bf16.msra.mxu0 %v1425
    %1472 = vmatpush.bf16.msra.mxu0 %v1423
    %1473 = vmatpush.bf16.msra.mxu0 %v1421
    %1474 = vmatmul.bf16.gmra.mxu0 %v1349
    %v1475 = vpop.f32.mrf.mxu0
    %v1476 = vadd.f32 %v1369, %v1475
    %v1477 = vpop.f32.mrf.mxu0
    %v1478 = vadd.f32 %v1369, %v1477
    %1479 = vdwg.mxu0
    %1480 = vst [vmem:[#allocation10] sm:$0xff] %v1462
    %1481 = vst [vmem:[#allocation10 + $0x8] sm:$0xff] %v1476
    %1482 = vst [vmem:[#allocation10 + $0x10] sm:$0xff] %v1464
    %1483 = vst [vmem:[#allocation10 + $0x18] sm:$0xff] %v1478
    // Predicated region
    $region54: #{tpu_custom_call.1} parent=1 // pred_check
      _
    $region55: #{tpu_custom_call.1} parent=1 // pred_check_branch
      %1485 = sbr.rel (0) target = $region57
    $region56: #{tpu_custom_call.1} parent=1 // pred_region
      %1487 = vsyncadd [#allocation4], 0
      %s1488 = sshll.u32 [#allocation10], 4
      %s1489 = int_to_ptr.vmem [resolvable:$true] %s1488
      %s1490 = sshll.u32 %s9, 4
      %s1491 = int_to_ptr.hbm [resolvable:$true] %s1490
      %1496 = dma.vmem_to_hbm [thread:$0]  %s1489, 512, %s1491, [#allocation4], 256, 256, 16
    $region57: #{tpu_custom_call.1} parent=1 // pred_fallthru
      _
    // Predicated region
    $region58: #{tpu_custom_call.1} parent=1 // pred_check
      _
    $region59: #{tpu_custom_call.1} parent=1 // pred_check_branch
      %1498 = sbr.rel (0) target = $region61
    $region60: #{tpu_custom_call.1} parent=1 // pred_region
      %1500 = dma.done [#allocation4], 512
    $region61: #{tpu_custom_call.1} parent=1 // pred_fallthru
      _
    %1501 = vsyncpa [#allocation3], 1
    %1502 = vsyncpa [#allocation6], 1
    %1503 = vsyncpa [#allocation9], 1
    %1504 = vsyncpa [#allocation4], 1

</llo_original>
